<compile_context>
chip_gen: v7x
topology: tpu7x:2x2x1
jax: 0.10.0
libtpu: 0.0.40
codegen_flags: <defaults>
</compile_context>

<pallas_src>
import jax
import jax.numpy as jnp
import numpy as np
from jax.experimental import pallas as pl
from jax.experimental.pallas import tpu as pltpu

NUM_BRANCHES = 5   # ReLU, Tanh, Sigmoid, LeakyReLU(0.2), identity
NUM_NONLIN = 4     # nonlinear branches kept as separate slabs
LANE = 128
SUBLANE = 8


def _round_up(n, m):
    return ((n + m - 1) // m) * m


# --------------------------------------------------------------------------
# Fused kernel factory (num_cells / num_mixed_ops static -> full static unroll)
# --------------------------------------------------------------------------
def _make_fused_kernel(num_cells, num_mixed_ops, hidden_dim, hid_pad):
    K_nl = NUM_NONLIN * num_mixed_ops   # nonlinear slabs per cell

    def kernel(mixw_ref, x_ref, *refs):
        # refs = (w0, b0, w1, ..., w_{num_cells-1}, w_out, o_ref)
        o_ref = refs[-1]
        wout_ref = refs[-2]

        h = x_ref[...]                                     # (B, input_dim) f32
        lane = jax.lax.broadcasted_iota(jnp.int32, (h.shape[0], hid_pad), 1)

        for c in range(num_cells):
            if c == 0:
                # First cell: raw x contraction, bias as a separate (1, K*hid_pad) row.
                y_all = (jnp.dot(h, refs[0][...],
                                 preferred_element_type=jnp.float32)
                         + refs[1][...])
            else:
                # Bias is folded into row `hidden_dim` of the packed weight; the
                # 1.0 installed into lane `hidden_dim` of h picks it up.
                y_all = jnp.dot(h, refs[1 + c][...],
                                preferred_element_type=jnp.float32)

            # Identity slab: mix weights + weights pre-combined at pack time,
            # so its coefficient is exactly 1 -> use it to seed the accumulator.
            acc = y_all[:, K_nl * hid_pad:(K_nl + 1) * hid_pad]
            for k in range(K_nl):          # statically unrolled
                y = y_all[:, k * hid_pad:(k + 1) * hid_pad]
                br = k % NUM_NONLIN
                if br == 0:
                    ya = jnp.maximum(y, 0.0)                   # ReLU
                elif br == 1:
                    ya = jnp.tanh(y)                           # Tanh
                elif br == 2:
                    ya = 0.5 * (jnp.tanh(0.5 * y) + 1.0)       # Sigmoid (1 EUP op)
                else:
                    ya = jnp.where(y > 0.0, y, 0.2 * y)        # LeakyReLU(0.2)
                acc = acc + mixw_ref[c * K_nl + k] * ya

            # Install the bias lane for the next packed matmul.  Other pad lanes
            # (> hidden_dim) may hold activation-of-zero garbage; it is
            # neutralised by the zero rows of the next packed weight.
            h = jnp.where(lane == hidden_dim, 1.0, acc)

        # Out layer: bias folded into row `hidden_dim` of wout.
        o_ref[...] = jnp.dot(h, wout_ref[...], preferred_element_type=jnp.float32)

    return kernel


# --------------------------------------------------------------------------
# One-time packing (init-time, NOT on the per-call path)
# --------------------------------------------------------------------------
def pack_params(params):
    cells = params["cells"]
    num_cells = len(cells)
    K5, _, hidden_dim = cells[0]["W"].shape
    num_mixed_ops = K5 // NUM_BRANCHES
    proj_dim = params["out_W"].shape[1]

    K_nl = NUM_NONLIN * num_mixed_ops
    K_eff = K_nl + 1
    hid_pad = _round_up(hidden_dim + 1, LANE)   # +1 lane reserved for folded bias
    proj_pad = _round_up(proj_dim, LANE)

    hi = jax.lax.Precision.HIGHEST
    flat = []
    mixw_rows = []
    for c, cell in enumerate(cells):
        W = cell["W"].reshape(num_mixed_ops, NUM_BRANCHES, -1, hidden_dim)
        b = cell["b"].reshape(num_mixed_ops, NUM_BRANCHES, hidden_dim)
        mixw = cell["mixw"].reshape(num_mixed_ops, NUM_BRANCHES)
        d_in = W.shape[2]

        # Nonlinear slabs keep raw W/b; mixw multiplies post-activation in-kernel.
        W_nl = W[:, :NUM_NONLIN].reshape(K_nl, d_in, hidden_dim)
        b_nl = b[:, :NUM_NONLIN].reshape(K_nl, hidden_dim)
        # Identity branch is linear: fold mixw into weights and merge mixed ops.
        W_id = jnp.einsum("m,mio->io", mixw[:, 4], W[:, 4], precision=hi)
        b_id = jnp.einsum("m,mo->o", mixw[:, 4], b[:, 4], precision=hi)
        W_slabs = jnp.concatenate([W_nl, W_id[None]], axis=0)     # (K_eff, d_in, hid)
        b_slabs = jnp.concatenate([b_nl, b_id[None]], axis=0)     # (K_eff, hid)

        W_slabs = jnp.pad(W_slabs, ((0, 0), (0, 0), (0, hid_pad - hidden_dim)))
        b_row = jnp.pad(b_slabs, ((0, 0), (0, hid_pad - hidden_dim))
                        ).reshape(1, K_eff * hid_pad)
        W_rows = jnp.transpose(W_slabs, (1, 0, 2)).reshape(d_in, K_eff * hid_pad)

        if c == 0:
            flat += [W_rows, b_row]          # raw-x contraction: keep bias operand
        else:
            zeros = jnp.zeros((hid_pad - hidden_dim - 1, K_eff * hid_pad), jnp.float32)
            flat.append(jnp.concatenate([W_rows, b_row, zeros], axis=0))
        mixw_rows.append(mixw[:, :NUM_NONLIN].reshape(K_nl))

    # Output layer: bias folded into row `hidden_dim`.
    Wout = jnp.pad(params["out_W"], ((0, 0), (0, proj_pad - proj_dim)))
    bout = jnp.pad(params["out_b"], ((0, proj_pad - proj_dim),)).reshape(1, proj_pad)
    zeros = jnp.zeros((hid_pad - hidden_dim - 1, proj_pad), jnp.float32)
    flat.append(jnp.concatenate([Wout, bout, zeros], axis=0))

    return {
        "mixw": jnp.concatenate(mixw_rows),            # 1-D SMEM (num_cells*K_nl,)
        "tensors": tuple(jax.device_put(t) for t in flat),
        "meta": dict(num_cells=num_cells, num_mixed_ops=num_mixed_ops,
                     hidden_dim=hidden_dim, hid_pad=hid_pad,
                     proj_dim=proj_dim, proj_pad=proj_pad),
    }


# --------------------------------------------------------------------------
# Per-call forward: one pallas_call + one slice, nothing else
# --------------------------------------------------------------------------
def projection_head_forward(x, packed):
    meta = packed["meta"]
    B = x.shape[0]
    kernel = _make_fused_kernel(meta["num_cells"], meta["num_mixed_ops"],
                                meta["hidden_dim"], meta["hid_pad"])
    n_vmem_in = 1 + len(packed["tensors"])   # x + all packed parameters

    out = pl.pallas_call(
        kernel,
        out_shape=jax.ShapeDtypeStruct((B, meta["proj_pad"]), jnp.float32),
        in_specs=[pl.BlockSpec(memory_space=pltpu.MemorySpace.SMEM)]
        + [pl.BlockSpec(memory_space=pltpu.MemorySpace.VMEM)] * n_vmem_in,
        out_specs=pl.BlockSpec(memory_space=pltpu.MemorySpace.VMEM),
    )(packed["mixw"], x, *packed["tensors"])

    return out[:, :meta["proj_dim"]]


# --------------------------------------------------------------------------
# Parameter construction (deterministic, synthetic) matching the PyTorch module
# --------------------------------------------------------------------------
def init_params(key, input_dim, hidden_dim, proj_dim, num_cells, num_mixed_ops):
    dims = [input_dim] + [hidden_dim] * num_cells
    cells = []
    for i in range(num_cells):
        d_in, d_out = dims[i], dims[i + 1]
        K = num_mixed_ops * NUM_BRANCHES
        key, kw, kb = jax.random.split(key, 3)
        bound = 1.0 / np.sqrt(d_in)
        W = jax.random.uniform(kw, (K, d_in, d_out), jnp.float32, -bound, bound)
        b = jax.random.uniform(kb, (K, d_out), jnp.float32, -bound, bound)
        # alpha initialized to zeros in the PyTorch module -> uniform softmax
        alpha = jnp.zeros((num_mixed_ops, NUM_BRANCHES), jnp.float32)
        mixw = (jax.nn.softmax(alpha, axis=-1) / num_mixed_ops).reshape(K)
        cells.append({"W": W, "b": b, "mixw": mixw})
    key, kw, kb = jax.random.split(key, 3)
    bound = 1.0 / np.sqrt(dims[-1])
    out_W = jax.random.uniform(kw, (dims[-1], proj_dim), jnp.float32, -bound, bound)
    out_b = jax.random.uniform(kb, (proj_dim,), jnp.float32, -bound, bound)
    return {"cells": cells, "out_W": out_W, "out_b": out_b}


# --------------------------------------------------------------------------
# Pure-JAX reference (mirrors the PyTorch forward exactly)
# --------------------------------------------------------------------------
def projection_head_ref(x, params):
    hi = jax.lax.Precision.HIGHEST
    acts = [
        lambda y: jnp.maximum(y, 0.0),
        jnp.tanh,
        jax.nn.sigmoid,
        lambda y: jnp.where(y > 0, y, 0.2 * y),
        lambda y: y,
    ]
    for cell in params["cells"]:
        K = cell["W"].shape[0]
        acc = jnp.zeros((x.shape[0], cell["W"].shape[2]), jnp.float32)
        for k in range(K):
            y = jnp.dot(x, cell["W"][k], precision=hi) + cell["b"][k]
            acc = acc + cell["mixw"][k] * acts[k % NUM_BRANCHES](y)
        x = acc
    return jnp.dot(x, params["out_W"], precision=hi) + params["out_b"]


if __name__ == "__main__":
    # Small, module-consistent shapes.
    input_dim, hidden_dim, proj_dim = 32, 32, 16
    num_cells, num_mixed_ops = 2, 2
    batch = 8

    key = jax.random.PRNGKey(0)
    kx, kp = jax.random.split(key)
    x = jax.random.normal(kx, (batch, input_dim), jnp.float32)
    params = init_params(kp, input_dim, hidden_dim, proj_dim, num_cells, num_mixed_ops)

    # One-time packing (init-time), then the hot path is a single pallas_call.
    packed = pack_params(params)
    jax.block_until_ready(packed["tensors"])

    out = projection_head_forward(x, packed)
    jax.block_until_ready(out)

    ref = projection_head_ref(x, params)
    np.testing.assert_allclose(np.asarray(out), np.asarray(ref), rtol=1e-4, atol=1e-5)

    print("KERNEL_OK")
</pallas_src>

<mosaic_0001>
module attributes {stable_mosaic.version = 11 : i64} {
  func.func @kernel(%arg0: memref<16xf32, #tpu.memory_space<smem>>, %arg1: memref<8x32xf32, #tpu.memory_space<vmem>>, %arg2: memref<32x1152xf32, #tpu.memory_space<vmem>>, %arg3: memref<1x1152xf32, #tpu.memory_space<vmem>>, %arg4: memref<128x1152xf32, #tpu.memory_space<vmem>>, %arg5: memref<128x128xf32, #tpu.memory_space<vmem>>, %arg6: memref<8x128xf32, #tpu.memory_space<vmem>>) attributes {dimension_semantics = [], scalar_prefetch = 0 : i64, scratch_operands = 0 : i64, tpu.core_type = #tpu.core_type<tc>} {
    %c0 = arith.constant 0 : index
    %c0_0 = arith.constant 0 : index
    %0 = vector.load %arg1[%c0, %c0_0] : memref<8x32xf32, #tpu.memory_space<vmem>>, vector<8x32xf32>
    %1 = tpu.iota {dimensions = array<i32: 1>} : vector<8x128xi32>
    %c0_1 = arith.constant 0 : index
    %c0_2 = arith.constant 0 : index
    %2 = vector.load %arg2[%c0_1, %c0_2] : memref<32x1152xf32, #tpu.memory_space<vmem>>, vector<32x1152xf32>
    %cst = arith.constant dense<0.000000e+00> : vector<8x1152xf32>
    %3 = tpu.matmul %0, %2, %cst {dimension_numbers = #tpu.dot_dimension_numbers<[1], [0], [0], [1], [0, 0, 1, 1], [], []>} : vector<8x32xf32>, vector<32x1152xf32>, vector<8x1152xf32> -> vector<8x1152xf32>
    %c0_3 = arith.constant 0 : index
    %c0_4 = arith.constant 0 : index
    %4 = vector.load %arg3[%c0_3, %c0_4] : memref<1x1152xf32, #tpu.memory_space<vmem>>, vector<1x1152xf32>
    %5 = vector.broadcast %4 : vector<1x1152xf32> to vector<8x1152xf32>
    %6 = arith.addf %3, %5 : vector<8x1152xf32>
    %7 = vector.extract_strided_slice %6 {offsets = [0, 1024], sizes = [8, 128], strides = [1, 1]} : vector<8x1152xf32> to vector<8x128xf32>
    %8 = vector.extract_strided_slice %6 {offsets = [0, 0], sizes = [8, 128], strides = [1, 1]} : vector<8x1152xf32> to vector<8x128xf32>
    %cst_5 = arith.constant 0.000000e+00 : f32
    %9 = vector.broadcast %cst_5 : f32 to vector<8x128xf32>
    %10 = arith.maximumf %8, %9 : vector<8x128xf32>
    %c0_6 = arith.constant 0 : index
    %11 = memref.load %arg0[%c0_6] : memref<16xf32, #tpu.memory_space<smem>>
    %12 = vector.broadcast %11 : f32 to vector<8x128xf32>
    %13 = arith.mulf %12, %10 : vector<8x128xf32>
    %14 = arith.addf %7, %13 : vector<8x128xf32>
    %15 = vector.extract_strided_slice %6 {offsets = [0, 128], sizes = [8, 128], strides = [1, 1]} : vector<8x1152xf32> to vector<8x128xf32>
    %16 = math.tanh %15 : vector<8x128xf32>
    %c1 = arith.constant 1 : index
    %17 = memref.load %arg0[%c1] : memref<16xf32, #tpu.memory_space<smem>>
    %18 = vector.broadcast %17 : f32 to vector<8x128xf32>
    %19 = arith.mulf %18, %16 : vector<8x128xf32>
    %20 = arith.addf %14, %19 : vector<8x128xf32>
    %21 = vector.extract_strided_slice %6 {offsets = [0, 256], sizes = [8, 128], strides = [1, 1]} : vector<8x1152xf32> to vector<8x128xf32>
    %cst_7 = arith.constant 5.000000e-01 : f32
    %22 = vector.broadcast %cst_7 : f32 to vector<8x128xf32>
    %23 = arith.mulf %22, %21 : vector<8x128xf32>
    %24 = math.tanh %23 : vector<8x128xf32>
    %cst_8 = arith.constant 1.000000e+00 : f32
    %25 = vector.broadcast %cst_8 : f32 to vector<8x128xf32>
    %26 = arith.addf %24, %25 : vector<8x128xf32>
    %cst_9 = arith.constant 5.000000e-01 : f32
    %27 = vector.broadcast %cst_9 : f32 to vector<8x128xf32>
    %28 = arith.mulf %27, %26 : vector<8x128xf32>
    %c2 = arith.constant 2 : index
    %29 = memref.load %arg0[%c2] : memref<16xf32, #tpu.memory_space<smem>>
    %30 = vector.broadcast %29 : f32 to vector<8x128xf32>
    %31 = arith.mulf %30, %28 : vector<8x128xf32>
    %32 = arith.addf %20, %31 : vector<8x128xf32>
    %33 = vector.extract_strided_slice %6 {offsets = [0, 384], sizes = [8, 128], strides = [1, 1]} : vector<8x1152xf32> to vector<8x128xf32>
    %cst_10 = arith.constant 0.000000e+00 : f32
    %34 = vector.broadcast %cst_10 : f32 to vector<8x128xf32>
    %35 = arith.cmpf ogt, %33, %34 : vector<8x128xf32>
    %cst_11 = arith.constant 2.000000e-01 : f32
    %36 = vector.broadcast %cst_11 : f32 to vector<8x128xf32>
    %37 = arith.mulf %36, %33 : vector<8x128xf32>
    %38 = arith.select %35, %33, %37 : vector<8x128xi1>, vector<8x128xf32>
    %c3 = arith.constant 3 : index
    %39 = memref.load %arg0[%c3] : memref<16xf32, #tpu.memory_space<smem>>
    %40 = vector.broadcast %39 : f32 to vector<8x128xf32>
    %41 = arith.mulf %40, %38 : vector<8x128xf32>
    %42 = arith.addf %32, %41 : vector<8x128xf32>
    %43 = vector.extract_strided_slice %6 {offsets = [0, 512], sizes = [8, 128], strides = [1, 1]} : vector<8x1152xf32> to vector<8x128xf32>
    %cst_12 = arith.constant 0.000000e+00 : f32
    %44 = vector.broadcast %cst_12 : f32 to vector<8x128xf32>
    %45 = arith.maximumf %43, %44 : vector<8x128xf32>
    %c4 = arith.constant 4 : index
    %46 = memref.load %arg0[%c4] : memref<16xf32, #tpu.memory_space<smem>>
    %47 = vector.broadcast %46 : f32 to vector<8x128xf32>
    %48 = arith.mulf %47, %45 : vector<8x128xf32>
    %49 = arith.addf %42, %48 : vector<8x128xf32>
    %50 = vector.extract_strided_slice %6 {offsets = [0, 640], sizes = [8, 128], strides = [1, 1]} : vector<8x1152xf32> to vector<8x128xf32>
    %51 = math.tanh %50 : vector<8x128xf32>
    %c5 = arith.constant 5 : index
    %52 = memref.load %arg0[%c5] : memref<16xf32, #tpu.memory_space<smem>>
    %53 = vector.broadcast %52 : f32 to vector<8x128xf32>
    %54 = arith.mulf %53, %51 : vector<8x128xf32>
    %55 = arith.addf %49, %54 : vector<8x128xf32>
    %56 = vector.extract_strided_slice %6 {offsets = [0, 768], sizes = [8, 128], strides = [1, 1]} : vector<8x1152xf32> to vector<8x128xf32>
    %cst_13 = arith.constant 5.000000e-01 : f32
    %57 = vector.broadcast %cst_13 : f32 to vector<8x128xf32>
    %58 = arith.mulf %57, %56 : vector<8x128xf32>
    %59 = math.tanh %58 : vector<8x128xf32>
    %cst_14 = arith.constant 1.000000e+00 : f32
    %60 = vector.broadcast %cst_14 : f32 to vector<8x128xf32>
    %61 = arith.addf %59, %60 : vector<8x128xf32>
    %cst_15 = arith.constant 5.000000e-01 : f32
    %62 = vector.broadcast %cst_15 : f32 to vector<8x128xf32>
    %63 = arith.mulf %62, %61 : vector<8x128xf32>
    %c6 = arith.constant 6 : index
    %64 = memref.load %arg0[%c6] : memref<16xf32, #tpu.memory_space<smem>>
    %65 = vector.broadcast %64 : f32 to vector<8x128xf32>
    %66 = arith.mulf %65, %63 : vector<8x128xf32>
    %67 = arith.addf %55, %66 : vector<8x128xf32>
    %68 = vector.extract_strided_slice %6 {offsets = [0, 896], sizes = [8, 128], strides = [1, 1]} : vector<8x1152xf32> to vector<8x128xf32>
    %cst_16 = arith.constant 0.000000e+00 : f32
    %69 = vector.broadcast %cst_16 : f32 to vector<8x128xf32>
    %70 = arith.cmpf ogt, %68, %69 : vector<8x128xf32>
    %cst_17 = arith.constant 2.000000e-01 : f32
    %71 = vector.broadcast %cst_17 : f32 to vector<8x128xf32>
    %72 = arith.mulf %71, %68 : vector<8x128xf32>
    %73 = arith.select %70, %68, %72 : vector<8x128xi1>, vector<8x128xf32>
    %c7 = arith.constant 7 : index
    %74 = memref.load %arg0[%c7] : memref<16xf32, #tpu.memory_space<smem>>
    %75 = vector.broadcast %74 : f32 to vector<8x128xf32>
    %76 = arith.mulf %75, %73 : vector<8x128xf32>
    %77 = arith.addf %67, %76 : vector<8x128xf32>
    %c32_i32 = arith.constant 32 : i32
    %78 = vector.broadcast %c32_i32 : i32 to vector<8x128xi32>
    %79 = arith.cmpi eq, %1, %78 : vector<8x128xi32>
    %cst_18 = arith.constant 1.000000e+00 : f32
    %80 = vector.broadcast %cst_18 : f32 to vector<8x128xf32>
    %81 = arith.select %79, %80, %77 : vector<8x128xi1>, vector<8x128xf32>
    %c0_19 = arith.constant 0 : index
    %c0_20 = arith.constant 0 : index
    %82 = vector.load %arg4[%c0_19, %c0_20] : memref<128x1152xf32, #tpu.memory_space<vmem>>, vector<128x1152xf32>
    %cst_21 = arith.constant dense<0.000000e+00> : vector<8x1152xf32>
    %83 = tpu.matmul %81, %82, %cst_21 {dimension_numbers = #tpu.dot_dimension_numbers<[1], [0], [0], [1], [0, 0, 1, 1], [], []>} : vector<8x128xf32>, vector<128x1152xf32>, vector<8x1152xf32> -> vector<8x1152xf32>
    %84 = vector.extract_strided_slice %83 {offsets = [0, 1024], sizes = [8, 128], strides = [1, 1]} : vector<8x1152xf32> to vector<8x128xf32>
    %85 = vector.extract_strided_slice %83 {offsets = [0, 0], sizes = [8, 128], strides = [1, 1]} : vector<8x1152xf32> to vector<8x128xf32>
    %cst_22 = arith.constant 0.000000e+00 : f32
    %86 = vector.broadcast %cst_22 : f32 to vector<8x128xf32>
    %87 = arith.maximumf %85, %86 : vector<8x128xf32>
    %c8 = arith.constant 8 : index
    %88 = memref.load %arg0[%c8] : memref<16xf32, #tpu.memory_space<smem>>
    %89 = vector.broadcast %88 : f32 to vector<8x128xf32>
    %90 = arith.mulf %89, %87 : vector<8x128xf32>
    %91 = arith.addf %84, %90 : vector<8x128xf32>
    %92 = vector.extract_strided_slice %83 {offsets = [0, 128], sizes = [8, 128], strides = [1, 1]} : vector<8x1152xf32> to vector<8x128xf32>
    %93 = math.tanh %92 : vector<8x128xf32>
    %c9 = arith.constant 9 : index
    %94 = memref.load %arg0[%c9] : memref<16xf32, #tpu.memory_space<smem>>
    %95 = vector.broadcast %94 : f32 to vector<8x128xf32>
    %96 = arith.mulf %95, %93 : vector<8x128xf32>
    %97 = arith.addf %91, %96 : vector<8x128xf32>
    %98 = vector.extract_strided_slice %83 {offsets = [0, 256], sizes = [8, 128], strides = [1, 1]} : vector<8x1152xf32> to vector<8x128xf32>
    %cst_23 = arith.constant 5.000000e-01 : f32
    %99 = vector.broadcast %cst_23 : f32 to vector<8x128xf32>
    %100 = arith.mulf %99, %98 : vector<8x128xf32>
    %101 = math.tanh %100 : vector<8x128xf32>
    %cst_24 = arith.constant 1.000000e+00 : f32
    %102 = vector.broadcast %cst_24 : f32 to vector<8x128xf32>
    %103 = arith.addf %101, %102 : vector<8x128xf32>
    %cst_25 = arith.constant 5.000000e-01 : f32
    %104 = vector.broadcast %cst_25 : f32 to vector<8x128xf32>
    %105 = arith.mulf %104, %103 : vector<8x128xf32>
    %c10 = arith.constant 10 : index
    %106 = memref.load %arg0[%c10] : memref<16xf32, #tpu.memory_space<smem>>
    %107 = vector.broadcast %106 : f32 to vector<8x128xf32>
    %108 = arith.mulf %107, %105 : vector<8x128xf32>
    %109 = arith.addf %97, %108 : vector<8x128xf32>
    %110 = vector.extract_strided_slice %83 {offsets = [0, 384], sizes = [8, 128], strides = [1, 1]} : vector<8x1152xf32> to vector<8x128xf32>
    %cst_26 = arith.constant 0.000000e+00 : f32
    %111 = vector.broadcast %cst_26 : f32 to vector<8x128xf32>
    %112 = arith.cmpf ogt, %110, %111 : vector<8x128xf32>
    %cst_27 = arith.constant 2.000000e-01 : f32
    %113 = vector.broadcast %cst_27 : f32 to vector<8x128xf32>
    %114 = arith.mulf %113, %110 : vector<8x128xf32>
    %115 = arith.select %112, %110, %114 : vector<8x128xi1>, vector<8x128xf32>
    %c11 = arith.constant 11 : index
    %116 = memref.load %arg0[%c11] : memref<16xf32, #tpu.memory_space<smem>>
    %117 = vector.broadcast %116 : f32 to vector<8x128xf32>
    %118 = arith.mulf %117, %115 : vector<8x128xf32>
    %119 = arith.addf %109, %118 : vector<8x128xf32>
    %120 = vector.extract_strided_slice %83 {offsets = [0, 512], sizes = [8, 128], strides = [1, 1]} : vector<8x1152xf32> to vector<8x128xf32>
    %cst_28 = arith.constant 0.000000e+00 : f32
    %121 = vector.broadcast %cst_28 : f32 to vector<8x128xf32>
    %122 = arith.maximumf %120, %121 : vector<8x128xf32>
    %c12 = arith.constant 12 : index
    %123 = memref.load %arg0[%c12] : memref<16xf32, #tpu.memory_space<smem>>
    %124 = vector.broadcast %123 : f32 to vector<8x128xf32>
    %125 = arith.mulf %124, %122 : vector<8x128xf32>
    %126 = arith.addf %119, %125 : vector<8x128xf32>
    %127 = vector.extract_strided_slice %83 {offsets = [0, 640], sizes = [8, 128], strides = [1, 1]} : vector<8x1152xf32> to vector<8x128xf32>
    %128 = math.tanh %127 : vector<8x128xf32>
    %c13 = arith.constant 13 : index
    %129 = memref.load %arg0[%c13] : memref<16xf32, #tpu.memory_space<smem>>
    %130 = vector.broadcast %129 : f32 to vector<8x128xf32>
    %131 = arith.mulf %130, %128 : vector<8x128xf32>
    %132 = arith.addf %126, %131 : vector<8x128xf32>
    %133 = vector.extract_strided_slice %83 {offsets = [0, 768], sizes = [8, 128], strides = [1, 1]} : vector<8x1152xf32> to vector<8x128xf32>
    %cst_29 = arith.constant 5.000000e-01 : f32
    %134 = vector.broadcast %cst_29 : f32 to vector<8x128xf32>
    %135 = arith.mulf %134, %133 : vector<8x128xf32>
    %136 = math.tanh %135 : vector<8x128xf32>
    %cst_30 = arith.constant 1.000000e+00 : f32
    %137 = vector.broadcast %cst_30 : f32 to vector<8x128xf32>
    %138 = arith.addf %136, %137 : vector<8x128xf32>
    %cst_31 = arith.constant 5.000000e-01 : f32
    %139 = vector.broadcast %cst_31 : f32 to vector<8x128xf32>
    %140 = arith.mulf %139, %138 : vector<8x128xf32>
    %c14 = arith.constant 14 : index
    %141 = memref.load %arg0[%c14] : memref<16xf32, #tpu.memory_space<smem>>
    %142 = vector.broadcast %141 : f32 to vector<8x128xf32>
    %143 = arith.mulf %142, %140 : vector<8x128xf32>
    %144 = arith.addf %132, %143 : vector<8x128xf32>
    %145 = vector.extract_strided_slice %83 {offsets = [0, 896], sizes = [8, 128], strides = [1, 1]} : vector<8x1152xf32> to vector<8x128xf32>
    %cst_32 = arith.constant 0.000000e+00 : f32
    %146 = vector.broadcast %cst_32 : f32 to vector<8x128xf32>
    %147 = arith.cmpf ogt, %145, %146 : vector<8x128xf32>
    %cst_33 = arith.constant 2.000000e-01 : f32
    %148 = vector.broadcast %cst_33 : f32 to vector<8x128xf32>
    %149 = arith.mulf %148, %145 : vector<8x128xf32>
    %150 = arith.select %147, %145, %149 : vector<8x128xi1>, vector<8x128xf32>
    %c15 = arith.constant 15 : index
    %151 = memref.load %arg0[%c15] : memref<16xf32, #tpu.memory_space<smem>>
    %152 = vector.broadcast %151 : f32 to vector<8x128xf32>
    %153 = arith.mulf %152, %150 : vector<8x128xf32>
    %154 = arith.addf %144, %153 : vector<8x128xf32>
    %c32_i32_34 = arith.constant 32 : i32
    %155 = vector.broadcast %c32_i32_34 : i32 to vector<8x128xi32>
    %156 = arith.cmpi eq, %1, %155 : vector<8x128xi32>
    %cst_35 = arith.constant 1.000000e+00 : f32
    %157 = vector.broadcast %cst_35 : f32 to vector<8x128xf32>
    %158 = arith.select %156, %157, %154 : vector<8x128xi1>, vector<8x128xf32>
    %c0_36 = arith.constant 0 : index
    %c0_37 = arith.constant 0 : index
    %159 = vector.load %arg5[%c0_36, %c0_37] : memref<128x128xf32, #tpu.memory_space<vmem>>, vector<128x128xf32>
    %cst_38 = arith.constant dense<0.000000e+00> : vector<8x128xf32>
    %160 = tpu.matmul %158, %159, %cst_38 {dimension_numbers = #tpu.dot_dimension_numbers<[1], [0], [0], [1], [0, 0, 1, 1], [], []>} : vector<8x128xf32>, vector<128x128xf32>, vector<8x128xf32> -> vector<8x128xf32>
    %c0_39 = arith.constant 0 : index
    %c0_40 = arith.constant 0 : index
    %161 = vector.load %arg6[%c0_39, %c0_40] : memref<8x128xf32, #tpu.memory_space<vmem>>, vector<8x128xf32>
    tpu.vector_store %arg6[%c0_39, %c0_40], %160 {strides = array<i32>} : memref<8x128xf32, #tpu.memory_space<vmem>>, vector<8x128xf32>,
    return
  }
}

</mosaic_0001>

<llo_original>
// kernel: tpu_custom_call.1
$region0: #{tpu_custom_call.1}
  #allocation0 [shape = 'u32[]', space=smem, size = 0x4, offset = 0x4, fixed_abs, tag = 'smem constant byte address 0x4 - core index']
  #allocation1 [shape = 'u32[144,128]{1,0:T(1,128)}', space=vmem, size = 0x12000, scoped, tag = 'internal scratch']
  %s0 = inlined_call_operand.hbm [shape: f32[16], index: 0, kind: input, shape index: {}]
  %s1 = inlined_call_operand.hbm [shape: f32[8,32], index: 1, kind: input, shape index: {}]
  %s2 = inlined_call_operand.hbm [shape: f32[32,1152], index: 2, kind: input, shape index: {}]
  %s3 = inlined_call_operand.vmem [shape: f32[1,1152], index: 3, kind: input, shape index: {}]
  %s4 = inlined_call_operand.hbm [shape: f32[128,1152], index: 4, kind: input, shape index: {}]
  %s5 = inlined_call_operand.hbm [shape: f32[128,128], index: 5, kind: input, shape index: {}]
  %s6 = inlined_call_operand.hbm [shape: f32[8,128], index: 6, kind: output, shape index: {}]
  %s7 = sld [smem:[#allocation0]]
  $region54: #{tpu_custom_call.1} parent=0
    _
  %s9 = ssub.s32 1, %s7
  %s10 = scalar_select 0, %s9, %s7
  $region1: #{tpu_custom_call.1} parent=0
    #allocation2 [shape = 'u8[512]{0}', space=smem, size = 0x200, scoped, tag = 'input window, operand 0, single buffered']
    #allocation3 [shape = 's32[1]{0}', space=sflag, size = 0x4, scoped, tag = 'scoped memory for tpu_custom_call.1']
    #allocation4 [shape = 's32[1]{0}', space=sflag, size = 0x4, scoped, tag = 'scoped memory for tpu_custom_call.1']
    #allocation5 [shape = 's32[1]{0}', space=sflag, size = 0x4, scoped, tag = 'scoped memory for tpu_custom_call.1']
    #allocation6 [shape = 'u8[4096]{0}', space=vmem, size = 0x1000, scoped, tag = 'input window, operand 1, single buffered']
    #allocation7 [shape = 'u8[147456]{0}', space=vmem, size = 0x24000, scoped, tag = 'input window, operand 2, single buffered']
    #allocation8 [shape = 's32[1]{0}', space=sflag, size = 0x4, scoped, tag = 'scoped memory for tpu_custom_call.1']
    #allocation9 [shape = 'u8[589824]{0}', space=vmem, size = 0x90000, scoped, tag = 'input window, operand 4, single buffered']
    #allocation10 [shape = 'u8[65536]{0}', space=vmem, size = 0x10000, scoped, tag = 'input window, operand 5, single buffered']
    #allocation11 [shape = 's32[1]{0}', space=sflag, size = 0x4, scoped, tag = 'scoped memory for tpu_custom_call.1']
    #allocation12 [shape = 'u8[4096]{0}', space=vmem, size = 0x1000, scoped, tag = 'output window, operand 0, single buffered']
    %11 = vsyncpa [#allocation5], 0
    %12 = vsyncpa [#allocation3], 0
    %13 = vsyncpa [#allocation8], 0
    %14 = vsyncpa [#allocation11], 0
    %15 = vsyncpa [#allocation4], 0
    // Predicated region
    $region2: #{tpu_custom_call.1} parent=1 // pred_check
      _
    $region3: #{tpu_custom_call.1} parent=1 // pred_check_branch
      %17 = sbr.rel (0) target = $region5
    $region4: #{tpu_custom_call.1} parent=1 // pred_region
      %s19 = ssub.s32 16, 16
      %20 = vsyncadd [#allocation5], %s19
      %23 = dma.hbm_to_smem %s0, 16, [#allocation2], [#allocation5]
    $region5: #{tpu_custom_call.1} parent=1 // pred_fallthru
      _
    // Predicated region
    $region6: #{tpu_custom_call.1} parent=1 // pred_check
      _
    $region7: #{tpu_custom_call.1} parent=1 // pred_check_branch
      %25 = sbr.rel (0) target = $region9
    $region8: #{tpu_custom_call.1} parent=1 // pred_region
      %s27 = ssub.s32 128, 128
      %28 = vsyncadd [#allocation3], %s27
      %s30 = sshll.u32 [#allocation6], 4
      %s31 = int_to_ptr.vmem [resolvable:$true] %s30
      %33 = dma.hbm_to_vmem [thread:$0]  %s1, 128, %s31, [#allocation3]
    $region9: #{tpu_custom_call.1} parent=1 // pred_fallthru
      _
    // Predicated region
    $region10: #{tpu_custom_call.1} parent=1 // pred_check
      _
    $region11: #{tpu_custom_call.1} parent=1 // pred_check_branch
      %35 = sbr.rel (0) target = $region13
    $region12: #{tpu_custom_call.1} parent=1 // pred_region
      %s37 = ssub.s32 4608, 4608
      %38 = vsyncadd [#allocation8], %s37
      %s39 = sshll.u32 [#allocation7], 4
      %s40 = int_to_ptr.vmem [resolvable:$true] %s39
      %45 = dma.hbm_to_vmem [thread:$0]  %s2, 4608, %s40, [#allocation8], 1152, 1152, 72
    $region13: #{tpu_custom_call.1} parent=1 // pred_fallthru
      _
    // Predicated region
    $region14: #{tpu_custom_call.1} parent=1 // pred_check
      _
    $region15: #{tpu_custom_call.1} parent=1 // pred_check_branch
      %47 = sbr.rel (0) target = $region17
    $region16: #{tpu_custom_call.1} parent=1 // pred_region
      _
    $region17: #{tpu_custom_call.1} parent=1 // pred_fallthru
      _
    // Predicated region
    $region18: #{tpu_custom_call.1} parent=1 // pred_check
      _
    $region19: #{tpu_custom_call.1} parent=1 // pred_check_branch
      %49 = sbr.rel (0) target = $region21
    $region20: #{tpu_custom_call.1} parent=1 // pred_region
      %s51 = ssub.s32 18432, 18432
      %52 = vsyncadd [#allocation8], %s51
      %s53 = sshll.u32 [#allocation9], 4
      %s54 = int_to_ptr.vmem [resolvable:$true] %s53
      %59 = dma.hbm_to_vmem [thread:$0]  %s4, 18432, %s54, [#allocation8], 1152, 1152, 72
    $region21: #{tpu_custom_call.1} parent=1 // pred_fallthru
      _
    // Predicated region
    $region22: #{tpu_custom_call.1} parent=1 // pred_check
      _
    $region23: #{tpu_custom_call.1} parent=1 // pred_check_branch
      %61 = sbr.rel (0) target = $region25
    $region24: #{tpu_custom_call.1} parent=1 // pred_region
      %s63 = ssub.s32 2048, 2048
      %64 = vsyncadd [#allocation11], %s63
      %s65 = sshll.u32 [#allocation10], 4
      %s66 = int_to_ptr.vmem [resolvable:$true] %s65
      %71 = dma.hbm_to_vmem [thread:$0]  %s5, 2048, %s66, [#allocation11], 128, 128, 8
    $region25: #{tpu_custom_call.1} parent=1 // pred_fallthru
      _
    // Predicated region
    $region26: #{tpu_custom_call.1} parent=1 // pred_check
      _
    $region27: #{tpu_custom_call.1} parent=1 // pred_check_branch
      %73 = sbr.rel (0) target = $region29
    $region28: #{tpu_custom_call.1} parent=1 // pred_region
      %74 = dma.done [#allocation5], 16
    $region29: #{tpu_custom_call.1} parent=1 // pred_fallthru
      _
    // Predicated region
    $region30: #{tpu_custom_call.1} parent=1 // pred_check
      _
    $region31: #{tpu_custom_call.1} parent=1 // pred_check_branch
      %76 = sbr.rel (0) target = $region33
    $region32: #{tpu_custom_call.1} parent=1 // pred_region
      %77 = dma.done [#allocation3], 128
    $region33: #{tpu_custom_call.1} parent=1 // pred_fallthru
      _
    // Predicated region
    $region34: #{tpu_custom_call.1} parent=1 // pred_check
      _
    $region35: #{tpu_custom_call.1} parent=1 // pred_check_branch
      %79 = sbr.rel (0) target = $region37
    $region36: #{tpu_custom_call.1} parent=1 // pred_region
      %80 = dma.done [#allocation8], 4608
    $region37: #{tpu_custom_call.1} parent=1 // pred_fallthru
      _
    // Predicated region
    $region38: #{tpu_custom_call.1} parent=1 // pred_check
      _
    $region39: #{tpu_custom_call.1} parent=1 // pred_check_branch
      %82 = sbr.rel (0) target = $region41
    $region40: #{tpu_custom_call.1} parent=1 // pred_region
      %83 = dma.done [#allocation8], 18432
    $region41: #{tpu_custom_call.1} parent=1 // pred_fallthru
      _
    // Predicated region
    $region42: #{tpu_custom_call.1} parent=1 // pred_check
      _
    $region43: #{tpu_custom_call.1} parent=1 // pred_check_branch
      %85 = sbr.rel (0) target = $region45
    $region44: #{tpu_custom_call.1} parent=1 // pred_region
      %86 = dma.done [#allocation11], 2048
    $region45: #{tpu_custom_call.1} parent=1 // pred_fallthru
      _
    %87 = sfence
    %v88 = vld [vmem:[#allocation6] sm:$0xff]
    %v89 = vlaneseq
    %v90 = vand.u32 %v89, 127
    %v91 = vld [vmem:[#allocation7] sm:$0xff]
    %v92 = vld [vmem:[#allocation7 + $0x8] sm:$0xff]
    %v93 = vld [vmem:[#allocation7 + $0x10] sm:$0xff]
    %v94 = vld [vmem:[#allocation7 + $0x18] sm:$0xff]
    %v95 = vld [vmem:[#allocation7 + $0x20] sm:$0xff]
    %v96 = vld [vmem:[#allocation7 + $0x28] sm:$0xff]
    %v97 = vld [vmem:[#allocation7 + $0x30] sm:$0xff]
    %v98 = vld [vmem:[#allocation7 + $0x38] sm:$0xff]
    %v99 = vld [vmem:[#allocation7 + $0x40] sm:$0xff]
    %v100 = vld [vmem:[#allocation7 + $0x48] sm:$0xff]
    %v101 = vld [vmem:[#allocation7 + $0x50] sm:$0xff]
    %v102 = vld [vmem:[#allocation7 + $0x58] sm:$0xff]
    %v103 = vld [vmem:[#allocation7 + $0x60] sm:$0xff]
    %v104 = vld [vmem:[#allocation7 + $0x68] sm:$0xff]
    %v105 = vld [vmem:[#allocation7 + $0x70] sm:$0xff]
    %v106 = vld [vmem:[#allocation7 + $0x78] sm:$0xff]
    %v107 = vld [vmem:[#allocation7 + $0x80] sm:$0xff]
    %v108 = vld [vmem:[#allocation7 + $0x88] sm:$0xff]
    %v109 = vld [vmem:[#allocation7 + $0x90] sm:$0xff]
    %v110 = vld [vmem:[#allocation7 + $0x98] sm:$0xff]
    %v111 = vld [vmem:[#allocation7 + $0xa0] sm:$0xff]
    %v112 = vld [vmem:[#allocation7 + $0xa8] sm:$0xff]
    %v113 = vld [vmem:[#allocation7 + $0xb0] sm:$0xff]
    %v114 = vld [vmem:[#allocation7 + $0xb8] sm:$0xff]
    %v115 = vld [vmem:[#allocation7 + $0xc0] sm:$0xff]
    %v116 = vld [vmem:[#allocation7 + $0xc8] sm:$0xff]
    %v117 = vld [vmem:[#allocation7 + $0xd0] sm:$0xff]
    %v118 = vld [vmem:[#allocation7 + $0xd8] sm:$0xff]
    %v119 = vld [vmem:[#allocation7 + $0xe0] sm:$0xff]
    %v120 = vld [vmem:[#allocation7 + $0xe8] sm:$0xff]
    %v121 = vld [vmem:[#allocation7 + $0xf0] sm:$0xff]
    %v122 = vld [vmem:[#allocation7 + $0xf8] sm:$0xff]
    %v123 = vld [vmem:[#allocation7 + $0x100] sm:$0xff]
    %v124 = vld [vmem:[#allocation7 + $0x108] sm:$0xff]
    %v125 = vld [vmem:[#allocation7 + $0x110] sm:$0xff]
    %v126 = vld [vmem:[#allocation7 + $0x118] sm:$0xff]
    %v127 = vld [vmem:[%s3] sm:$0xff]
    %v128 = vld [vmem:[%s3 + $0x8] sm:$0x1]
    %v131 = vlaneseq
    %v132 = vshrl.u32 %v131, 7
    %v133 = vsub.s32 0, %v132
    %v134 = vrot.slane %v127, %v133
    %v135 = vlaneseq
    %v136 = vshrl.u32 %v135, 7
    %v137 = vsub.s32 1, %v136
    %v138 = vrot.slane %v127, %v137
    %v139 = vlaneseq
    %v140 = vshrl.u32 %v139, 7
    %v141 = vsub.s32 2, %v140
    %v142 = vrot.slane %v127, %v141
    %v143 = vlaneseq
    %v144 = vshrl.u32 %v143, 7
    %v145 = vsub.s32 3, %v144
    %v146 = vrot.slane %v127, %v145
    %v147 = vlaneseq
    %v148 = vshrl.u32 %v147, 7
    %v149 = vsub.s32 4, %v148
    %v150 = vrot.slane %v127, %v149
    %v151 = vlaneseq
    %v152 = vshrl.u32 %v151, 7
    %v153 = vsub.s32 5, %v152
    %v154 = vrot.slane %v127, %v153
    %v155 = vlaneseq
    %v156 = vshrl.u32 %v155, 7
    %v157 = vsub.s32 6, %v156
    %v158 = vrot.slane %v127, %v157
    %v159 = vlaneseq
    %v160 = vshrl.u32 %v159, 7
    %v161 = vsub.s32 7, %v160
    %v162 = vrot.slane %v127, %v161
    %v163 = vlaneseq
    %v164 = vshrl.u32 %v163, 7
    %v165 = vsub.s32 0, %v164
    %v166 = vrot.slane %v128, %v165
    %vm176 = vcmask 261120
    %v178 = vsel %vm176, %v88, 0
    %180 = vmatprep.subr.mxu0 %v92
    %181 = vmatpush1.msra.mxu0 %v91
    %182 = vmatprep.subr.mxu0 %v101
    %183 = vmatpush1.msra.mxu0 %v100
    %184 = vmatprep.subr.mxu0 %v110
    %185 = vmatpush1.msra.mxu0 %v109
    %186 = vmatprep.subr.mxu0 %v119
    %187 = vmatpush1.msra.mxu0 %v118
    %188 = vmatprep.subr.mxu0 0.0
    %189 = vmatpush1.msra.mxu0 0.0
    %190 = vmatprep.subr.mxu0 0.0
    %191 = vmatpush1.msra.mxu0 0.0
    %192 = vmatprep.subr.mxu0 0.0
    %193 = vmatpush1.msra.mxu0 0.0
    %194 = vmatprep.subr.mxu0 0.0
    %195 = vmatpush1.msra.mxu0 0.0
    %196 = vmatprep.subr.mxu0 0.0
    %197 = vmatpush1.msra.mxu0 0.0
    %198 = vmatprep.subr.mxu0 0.0
    %199 = vmatpush1.msra.mxu0 0.0
    %200 = vmatprep.subr.mxu0 0.0
    %201 = vmatpush1.msra.mxu0 0.0
    %202 = vmatprep.subr.mxu0 0.0
    %203 = vmatpush1.msra.mxu0 0.0
    %204 = vmatprep.subr.mxu0 0.0
    %205 = vmatpush1.msra.mxu0 0.0
    %206 = vmatprep.subr.mxu0 0.0
    %207 = vmatpush1.msra.mxu0 0.0
    %208 = vmatprep.subr.mxu0 0.0
    %209 = vmatpush1.msra.mxu0 0.0
    %210 = vmatprep.subr.mxu0 0.0
    %211 = vmatpush1.msra.mxu0 0.0
    %212 = vmatprep.subr.mxu0 0.0
    %213 = vmatpush1.msra.mxu0 0.0
    %214 = vmatprep.subr.mxu0 0.0
    %215 = vmatpush1.msra.mxu0 0.0
    %216 = vmatprep.subr.mxu0 0.0
    %217 = vmatpush1.msra.mxu0 0.0
    %218 = vmatprep.subr.mxu0 0.0
    %219 = vmatpush1.msra.mxu0 0.0
    %220 = vmatprep.subr.mxu0 0.0
    %221 = vmatpush1.msra.mxu0 0.0
    %222 = vmatprep.subr.mxu0 0.0
    %223 = vmatpush1.msra.mxu0 0.0
    %224 = vmatprep.subr.mxu0 0.0
    %225 = vmatpush1.msra.mxu0 0.0
    %226 = vmatprep.subr.mxu0 0.0
    %227 = vmatpush1.msra.mxu0 0.0
    %228 = vmatprep.subr.mxu0 0.0
    %229 = vmatpush1.msra.mxu0 0.0
    %230 = vmatprep.subr.mxu0 0.0
    %231 = vmatpush1.msra.mxu0 0.0
    %232 = vmatprep.subr.mxu0 0.0
    %233 = vmatpush1.msra.mxu0 0.0
    %234 = vmatprep.subr.mxu0 0.0
    %235 = vmatpush1.msra.mxu0 0.0
    %236 = vmatprep.subr.mxu0 0.0
    %237 = vmatpush1.msra.mxu0 0.0
    %238 = vmatprep.subr.mxu0 0.0
    %239 = vmatpush1.msra.mxu0 0.0
    %240 = vmatprep.subr.mxu0 0.0
    %241 = vmatpush1.msra.mxu0 0.0
    %242 = vmatprep.subr.mxu0 0.0
    %243 = vmatpush1.msra.mxu0 0.0
    %244 = vmatprep.mubr.f32.mxu0 0.0
    %245 = vmatmul.mubr.f32.gmra.mrb[0].mxu0 %v178
    %v246 = vpop.f32.mrb[0].mxu0
    %v247 = vadd.f32 %v134, %v246
    %v248 = vpop.f32.mrb[0].mxu0
    %v249 = vadd.f32 %v138, %v248
    %250 = vdwg.mxu0
    %251 = vmatprep.subr.mxu0 %v94
    %252 = vmatpush1.msra.mxu0 %v93
    %253 = vmatprep.subr.mxu0 %v103
    %254 = vmatpush1.msra.mxu0 %v102
    %255 = vmatprep.subr.mxu0 %v112
    %256 = vmatpush1.msra.mxu0 %v111
    %257 = vmatprep.subr.mxu0 %v121
    %258 = vmatpush1.msra.mxu0 %v120
    %259 = vmatprep.subr.mxu0 0.0
    %260 = vmatpush1.msra.mxu0 0.0
    %261 = vmatprep.subr.mxu0 0.0
    %262 = vmatpush1.msra.mxu0 0.0
    %263 = vmatprep.subr.mxu0 0.0
    %264 = vmatpush1.msra.mxu0 0.0
    %265 = vmatprep.subr.mxu0 0.0
    %266 = vmatpush1.msra.mxu0 0.0
    %267 = vmatprep.subr.mxu0 0.0
    %268 = vmatpush1.msra.mxu0 0.0
    %269 = vmatprep.subr.mxu0 0.0
    %270 = vmatpush1.msra.mxu0 0.0
    %271 = vmatprep.subr.mxu0 0.0
    %272 = vmatpush1.msra.mxu0 0.0
    %273 = vmatprep.subr.mxu0 0.0
    %274 = vmatpush1.msra.mxu0 0.0
    %275 = vmatprep.subr.mxu0 0.0
    %276 = vmatpush1.msra.mxu0 0.0
    %277 = vmatprep.subr.mxu0 0.0
    %278 = vmatpush1.msra.mxu0 0.0
    %279 = vmatprep.subr.mxu0 0.0
    %280 = vmatpush1.msra.mxu0 0.0
    %281 = vmatprep.subr.mxu0 0.0
    %282 = vmatpush1.msra.mxu0 0.0
    %283 = vmatprep.subr.mxu0 0.0
    %284 = vmatpush1.msra.mxu0 0.0
    %285 = vmatprep.subr.mxu0 0.0
    %286 = vmatpush1.msra.mxu0 0.0
    %287 = vmatprep.subr.mxu0 0.0
    %288 = vmatpush1.msra.mxu0 0.0
    %289 = vmatprep.subr.mxu0 0.0
    %290 = vmatpush1.msra.mxu0 0.0
    %291 = vmatprep.subr.mxu0 0.0
    %292 = vmatpush1.msra.mxu0 0.0
    %293 = vmatprep.subr.mxu0 0.0
    %294 = vmatpush1.msra.mxu0 0.0
    %295 = vmatprep.subr.mxu0 0.0
    %296 = vmatpush1.msra.mxu0 0.0
    %297 = vmatprep.subr.mxu0 0.0
    %298 = vmatpush1.msra.mxu0 0.0
    %299 = vmatprep.subr.mxu0 0.0
    %300 = vmatpush1.msra.mxu0 0.0
    %301 = vmatprep.subr.mxu0 0.0
    %302 = vmatpush1.msra.mxu0 0.0
    %303 = vmatprep.subr.mxu0 0.0
    %304 = vmatpush1.msra.mxu0 0.0
    %305 = vmatprep.subr.mxu0 0.0
    %306 = vmatpush1.msra.mxu0 0.0
    %307 = vmatprep.subr.mxu0 0.0
    %308 = vmatpush1.msra.mxu0 0.0
    %309 = vmatprep.subr.mxu0 0.0
    %310 = vmatpush1.msra.mxu0 0.0
    %311 = vmatprep.subr.mxu0 0.0
    %312 = vmatpush1.msra.mxu0 0.0
    %313 = vmatprep.subr.mxu0 0.0
    %314 = vmatpush1.msra.mxu0 0.0
    %315 = vmatprep.mubr.f32.mxu0 0.0
    %316 = vmatmul.mubr.f32.gmra.mrb[0].mxu0 %v178
    %v317 = vpop.f32.mrb[0].mxu0
    %v318 = vadd.f32 %v142, %v317
    %v319 = vpop.f32.mrb[0].mxu0
    %v320 = vadd.f32 %v146, %v319
    %321 = vdwg.mxu0
    %322 = vmatprep.subr.mxu0 %v96
    %323 = vmatpush1.msra.mxu0 %v95
    %324 = vmatprep.subr.mxu0 %v105
    %325 = vmatpush1.msra.mxu0 %v104
    %326 = vmatprep.subr.mxu0 %v114
    %327 = vmatpush1.msra.mxu0 %v113
    %328 = vmatprep.subr.mxu0 %v123
    %329 = vmatpush1.msra.mxu0 %v122
    %330 = vmatprep.subr.mxu0 0.0
    %331 = vmatpush1.msra.mxu0 0.0
    %332 = vmatprep.subr.mxu0 0.0
    %333 = vmatpush1.msra.mxu0 0.0
    %334 = vmatprep.subr.mxu0 0.0
    %335 = vmatpush1.msra.mxu0 0.0
    %336 = vmatprep.subr.mxu0 0.0
    %337 = vmatpush1.msra.mxu0 0.0
    %338 = vmatprep.subr.mxu0 0.0
    %339 = vmatpush1.msra.mxu0 0.0
    %340 = vmatprep.subr.mxu0 0.0
    %341 = vmatpush1.msra.mxu0 0.0
    %342 = vmatprep.subr.mxu0 0.0
    %343 = vmatpush1.msra.mxu0 0.0
    %344 = vmatprep.subr.mxu0 0.0
    %345 = vmatpush1.msra.mxu0 0.0
    %346 = vmatprep.subr.mxu0 0.0
    %347 = vmatpush1.msra.mxu0 0.0
    %348 = vmatprep.subr.mxu0 0.0
    %349 = vmatpush1.msra.mxu0 0.0
    %350 = vmatprep.subr.mxu0 0.0
    %351 = vmatpush1.msra.mxu0 0.0
    %352 = vmatprep.subr.mxu0 0.0
    %353 = vmatpush1.msra.mxu0 0.0
    %354 = vmatprep.subr.mxu0 0.0
    %355 = vmatpush1.msra.mxu0 0.0
    %356 = vmatprep.subr.mxu0 0.0
    %357 = vmatpush1.msra.mxu0 0.0
    %358 = vmatprep.subr.mxu0 0.0
    %359 = vmatpush1.msra.mxu0 0.0
    %360 = vmatprep.subr.mxu0 0.0
    %361 = vmatpush1.msra.mxu0 0.0
    %362 = vmatprep.subr.mxu0 0.0
    %363 = vmatpush1.msra.mxu0 0.0
    %364 = vmatprep.subr.mxu0 0.0
    %365 = vmatpush1.msra.mxu0 0.0
    %366 = vmatprep.subr.mxu0 0.0
    %367 = vmatpush1.msra.mxu0 0.0
    %368 = vmatprep.subr.mxu0 0.0
    %369 = vmatpush1.msra.mxu0 0.0
    %370 = vmatprep.subr.mxu0 0.0
    %371 = vmatpush1.msra.mxu0 0.0
    %372 = vmatprep.subr.mxu0 0.0
    %373 = vmatpush1.msra.mxu0 0.0
    %374 = vmatprep.subr.mxu0 0.0
    %375 = vmatpush1.msra.mxu0 0.0
    %376 = vmatprep.subr.mxu0 0.0
    %377 = vmatpush1.msra.mxu0 0.0
    %378 = vmatprep.subr.mxu0 0.0
    %379 = vmatpush1.msra.mxu0 0.0
    %380 = vmatprep.subr.mxu0 0.0
    %381 = vmatpush1.msra.mxu0 0.0
    %382 = vmatprep.subr.mxu0 0.0
    %383 = vmatpush1.msra.mxu0 0.0
    %384 = vmatprep.subr.mxu0 0.0
    %385 = vmatpush1.msra.mxu0 0.0
    %386 = vmatprep.mubr.f32.mxu0 0.0
    %387 = vmatmul.mubr.f32.gmra.mrb[0].mxu0 %v178
    %v388 = vpop.f32.mrb[0].mxu0
    %v389 = vadd.f32 %v150, %v388
    %v390 = vpop.f32.mrb[0].mxu0
    %v391 = vadd.f32 %v154, %v390
    %392 = vdwg.mxu0
    %393 = vmatprep.subr.mxu0 %v98
    %394 = vmatpush1.msra.mxu0 %v97
    %395 = vmatprep.subr.mxu0 %v107
    %396 = vmatpush1.msra.mxu0 %v106
    %397 = vmatprep.subr.mxu0 %v116
    %398 = vmatpush1.msra.mxu0 %v115
    %399 = vmatprep.subr.mxu0 %v125
    %400 = vmatpush1.msra.mxu0 %v124
    %401 = vmatprep.subr.mxu0 0.0
    %402 = vmatpush1.msra.mxu0 0.0
    %403 = vmatprep.subr.mxu0 0.0
    %404 = vmatpush1.msra.mxu0 0.0
    %405 = vmatprep.subr.mxu0 0.0
    %406 = vmatpush1.msra.mxu0 0.0
    %407 = vmatprep.subr.mxu0 0.0
    %408 = vmatpush1.msra.mxu0 0.0
    %409 = vmatprep.subr.mxu0 0.0
    %410 = vmatpush1.msra.mxu0 0.0
    %411 = vmatprep.subr.mxu0 0.0
    %412 = vmatpush1.msra.mxu0 0.0
    %413 = vmatprep.subr.mxu0 0.0
    %414 = vmatpush1.msra.mxu0 0.0
    %415 = vmatprep.subr.mxu0 0.0
    %416 = vmatpush1.msra.mxu0 0.0
    %417 = vmatprep.subr.mxu0 0.0
    %418 = vmatpush1.msra.mxu0 0.0
    %419 = vmatprep.subr.mxu0 0.0
    %420 = vmatpush1.msra.mxu0 0.0
    %421 = vmatprep.subr.mxu0 0.0
    %422 = vmatpush1.msra.mxu0 0.0
    %423 = vmatprep.subr.mxu0 0.0
    %424 = vmatpush1.msra.mxu0 0.0
    %425 = vmatprep.subr.mxu0 0.0
    %426 = vmatpush1.msra.mxu0 0.0
    %427 = vmatprep.subr.mxu0 0.0
    %428 = vmatpush1.msra.mxu0 0.0
    %429 = vmatprep.subr.mxu0 0.0
    %430 = vmatpush1.msra.mxu0 0.0
    %431 = vmatprep.subr.mxu0 0.0
    %432 = vmatpush1.msra.mxu0 0.0
    %433 = vmatprep.subr.mxu0 0.0
    %434 = vmatpush1.msra.mxu0 0.0
    %435 = vmatprep.subr.mxu0 0.0
    %436 = vmatpush1.msra.mxu0 0.0
    %437 = vmatprep.subr.mxu0 0.0
    %438 = vmatpush1.msra.mxu0 0.0
    %439 = vmatprep.subr.mxu0 0.0
    %440 = vmatpush1.msra.mxu0 0.0
    %441 = vmatprep.subr.mxu0 0.0
    %442 = vmatpush1.msra.mxu0 0.0
    %443 = vmatprep.subr.mxu0 0.0
    %444 = vmatpush1.msra.mxu0 0.0
    %445 = vmatprep.subr.mxu0 0.0
    %446 = vmatpush1.msra.mxu0 0.0
    %447 = vmatprep.subr.mxu0 0.0
    %448 = vmatpush1.msra.mxu0 0.0
    %449 = vmatprep.subr.mxu0 0.0
    %450 = vmatpush1.msra.mxu0 0.0
    %451 = vmatprep.subr.mxu0 0.0
    %452 = vmatpush1.msra.mxu0 0.0
    %453 = vmatprep.subr.mxu0 0.0
    %454 = vmatpush1.msra.mxu0 0.0
    %455 = vmatprep.subr.mxu0 0.0
    %456 = vmatpush1.msra.mxu0 0.0
    %457 = vmatprep.mubr.f32.mxu0 0.0
    %458 = vmatmul.mubr.f32.gmra.mrb[0].mxu0 %v178
    %v459 = vpop.f32.mrb[0].mxu0
    %v460 = vadd.f32 %v158, %v459
    %v461 = vpop.f32.mrb[0].mxu0
    %v462 = vadd.f32 %v162, %v461
    %463 = vdwg.mxu0
    %464 = vmatprep.subr.mxu0 0.0
    %465 = vmatpush1.msra.mxu0 %v99
    %466 = vmatprep.subr.mxu0 0.0
    %467 = vmatpush1.msra.mxu0 %v108
    %468 = vmatprep.subr.mxu0 0.0
    %469 = vmatpush1.msra.mxu0 %v117
    %470 = vmatprep.subr.mxu0 0.0
    %471 = vmatpush1.msra.mxu0 %v126
    %472 = vmatprep.subr.mxu0 0.0
    %473 = vmatpush1.msra.mxu0 0.0
    %474 = vmatprep.subr.mxu0 0.0
    %475 = vmatpush1.msra.mxu0 0.0
    %476 = vmatprep.subr.mxu0 0.0
    %477 = vmatpush1.msra.mxu0 0.0
    %478 = vmatprep.subr.mxu0 0.0
    %479 = vmatpush1.msra.mxu0 0.0
    %480 = vmatprep.subr.mxu0 0.0
    %481 = vmatpush1.msra.mxu0 0.0
    %482 = vmatprep.subr.mxu0 0.0
    %483 = vmatpush1.msra.mxu0 0.0
    %484 = vmatprep.subr.mxu0 0.0
    %485 = vmatpush1.msra.mxu0 0.0
    %486 = vmatprep.subr.mxu0 0.0
    %487 = vmatpush1.msra.mxu0 0.0
    %488 = vmatprep.subr.mxu0 0.0
    %489 = vmatpush1.msra.mxu0 0.0
    %490 = vmatprep.subr.mxu0 0.0
    %491 = vmatpush1.msra.mxu0 0.0
    %492 = vmatprep.subr.mxu0 0.0
    %493 = vmatpush1.msra.mxu0 0.0
    %494 = vmatprep.subr.mxu0 0.0
    %495 = vmatpush1.msra.mxu0 0.0
    %496 = vmatprep.subr.mxu0 0.0
    %497 = vmatpush1.msra.mxu0 0.0
    %498 = vmatprep.subr.mxu0 0.0
    %499 = vmatpush1.msra.mxu0 0.0
    %500 = vmatprep.subr.mxu0 0.0
    %501 = vmatpush1.msra.mxu0 0.0
    %502 = vmatprep.subr.mxu0 0.0
    %503 = vmatpush1.msra.mxu0 0.0
    %504 = vmatprep.subr.mxu0 0.0
    %505 = vmatpush1.msra.mxu0 0.0
    %506 = vmatprep.subr.mxu0 0.0
    %507 = vmatpush1.msra.mxu0 0.0
    %508 = vmatprep.subr.mxu0 0.0
    %509 = vmatpush1.msra.mxu0 0.0
    %510 = vmatprep.subr.mxu0 0.0
    %511 = vmatpush1.msra.mxu0 0.0
    %512 = vmatprep.subr.mxu0 0.0
    %513 = vmatpush1.msra.mxu0 0.0
    %514 = vmatprep.subr.mxu0 0.0
    %515 = vmatpush1.msra.mxu0 0.0
    %516 = vmatprep.subr.mxu0 0.0
    %517 = vmatpush1.msra.mxu0 0.0
    %518 = vmatprep.subr.mxu0 0.0
    %519 = vmatpush1.msra.mxu0 0.0
    %520 = vmatprep.subr.mxu0 0.0
    %521 = vmatpush1.msra.mxu0 0.0
    %522 = vmatprep.subr.mxu0 0.0
    %523 = vmatpush1.msra.mxu0 0.0
    %524 = vmatprep.subr.mxu0 0.0
    %525 = vmatpush1.msra.mxu0 0.0
    %526 = vmatprep.subr.mxu0 0.0
    %527 = vmatpush1.msra.mxu0 0.0
    %528 = vmatprep.mubr.f32.mxu0 0.0
    %529 = vmatmul.mubr.f32.gmra.mrb[0].mxu0 %v178
    %v530 = vpop.f32.mrb[0].mxu0
    %v531 = vadd.f32 %v166, %v530
    %v532 = vpop.f32.mrb[0].mxu0
    %533 = vdwg.mxu0
    %v534 = vmax.f32 %v247, 0.0
    %s535 = sld [smem:[#allocation2]]
    %v536 = vstv %s535
    %v537 = vmul.f32 %v536, %v534
    %v538 = vadd.f32 %v531, %v537
    %v539 = vtanh.pop %v249
    %s540 = sld [smem:[#allocation2 + $0x1]]
    %v541 = vstv %s540
    %v542 = vmul.f32 %v541, %v539
    %v543 = vadd.f32 %v538, %v542
    %v544 = vmul.f32 %v318, 0.5
    %v545 = vtanh.pop %v544
    %v546 = vadd.f32 %v545, 1.0
    %v547 = vmul.f32 %v546, 0.5
    %s548 = sld [smem:[#allocation2 + $0x2]]
    %v549 = vstv %s548
    %v550 = vmul.f32 %v549, %v547
    %v551 = vadd.f32 %v543, %v550
    %vm552 = vcmp.gt.f32.partialorder %v320, 0.0
    %v553 = vmul.f32 %v320, 0.2
    %v554 = vsel %vm552, %v320, %v553
    %s555 = sld [smem:[#allocation2 + $0x3]]
    %v556 = vstv %s555
    %v557 = vmul.f32 %v556, %v554
    %v558 = vadd.f32 %v551, %v557
    %v559 = vmax.f32 %v389, 0.0
    %s560 = sld [smem:[#allocation2 + $0x4]]
    %v561 = vstv %s560
    %v562 = vmul.f32 %v561, %v559
    %v563 = vadd.f32 %v558, %v562
    %v564 = vtanh.pop %v391
    %s565 = sld [smem:[#allocation2 + $0x5]]
    %v566 = vstv %s565
    %v567 = vmul.f32 %v566, %v564
    %v568 = vadd.f32 %v563, %v567
    %v569 = vmul.f32 %v460, 0.5
    %v570 = vtanh.pop %v569
    %v571 = vadd.f32 %v570, 1.0
    %v572 = vmul.f32 %v571, 0.5
    %s573 = sld [smem:[#allocation2 + $0x6]]
    %v574 = vstv %s573
    %v575 = vmul.f32 %v574, %v572
    %v576 = vadd.f32 %v568, %v575
    %vm577 = vcmp.gt.f32.partialorder %v462, 0.0
    %v578 = vmul.f32 %v462, 0.2
    %v579 = vsel %vm577, %v462, %v578
    %s580 = sld [smem:[#allocation2 + $0x7]]
    %v581 = vstv %s580
    %v582 = vmul.f32 %v581, %v579
    %v583 = vadd.f32 %v576, %v582
    %vm584 = vcmp.eq.s32.totalorder %v90, 32
    %v585 = vsel %vm584, 1.0, %v583
    %v586 = vld [vmem:[#allocation9] sm:$0xff]
    %v587 = vld [vmem:[#allocation9 + $0x8] sm:$0xff]
    %v588 = vld [vmem:[#allocation9 + $0x10] sm:$0xff]
    %v589 = vld [vmem:[#allocation9 + $0x18] sm:$0xff]
    %v590 = vld [vmem:[#allocation9 + $0x20] sm:$0xff]
    %v591 = vld [vmem:[#allocation9 + $0x28] sm:$0xff]
    %v592 = vld [vmem:[#allocation9 + $0x30] sm:$0xff]
    %v593 = vld [vmem:[#allocation9 + $0x38] sm:$0xff]
    %v594 = vld [vmem:[#allocation9 + $0x40] sm:$0xff]
    %v595 = vld [vmem:[#allocation9 + $0x48] sm:$0xff]
    %v596 = vld [vmem:[#allocation9 + $0x50] sm:$0xff]
    %v597 = vld [vmem:[#allocation9 + $0x58] sm:$0xff]
    %v598 = vld [vmem:[#allocation9 + $0x60] sm:$0xff]
    %v599 = vld [vmem:[#allocation9 + $0x68] sm:$0xff]
    %v600 = vld [vmem:[#allocation9 + $0x70] sm:$0xff]
    %v601 = vld [vmem:[#allocation9 + $0x78] sm:$0xff]
    %v602 = vld [vmem:[#allocation9 + $0x80] sm:$0xff]
    %v603 = vld [vmem:[#allocation9 + $0x88] sm:$0xff]
    %v604 = vld [vmem:[#allocation9 + $0x90] sm:$0xff]
    %v605 = vld [vmem:[#allocation9 + $0x98] sm:$0xff]
    %v606 = vld [vmem:[#allocation9 + $0xa0] sm:$0xff]
    %v607 = vld [vmem:[#allocation9 + $0xa8] sm:$0xff]
    %v608 = vld [vmem:[#allocation9 + $0xb0] sm:$0xff]
    %v609 = vld [vmem:[#allocation9 + $0xb8] sm:$0xff]
    %v610 = vld [vmem:[#allocation9 + $0xc0] sm:$0xff]
    %v611 = vld [vmem:[#allocation9 + $0xc8] sm:$0xff]
    %v612 = vld [vmem:[#allocation9 + $0xd0] sm:$0xff]
    %v613 = vld [vmem:[#allocation9 + $0xd8] sm:$0xff]
    %v614 = vld [vmem:[#allocation9 + $0xe0] sm:$0xff]
    %v615 = vld [vmem:[#allocation9 + $0xe8] sm:$0xff]
    %v616 = vld [vmem:[#allocation9 + $0xf0] sm:$0xff]
    %v617 = vld [vmem:[#allocation9 + $0xf8] sm:$0xff]
    %v618 = vld [vmem:[#allocation9 + $0x100] sm:$0xff]
    %v619 = vld [vmem:[#allocation9 + $0x108] sm:$0xff]
    %v620 = vld [vmem:[#allocation9 + $0x110] sm:$0xff]
    %v621 = vld [vmem:[#allocation9 + $0x118] sm:$0xff]
    %v622 = vld [vmem:[#allocation9 + $0x120] sm:$0xff]
    %v623 = vld [vmem:[#allocation9 + $0x128] sm:$0xff]
    %v624 = vld [vmem:[#allocation9 + $0x130] sm:$0xff]
    %v625 = vld [vmem:[#allocation9 + $0x138] sm:$0xff]
    %v626 = vld [vmem:[#allocation9 + $0x140] sm:$0xff]
    %v627 = vld [vmem:[#allocation9 + $0x148] sm:$0xff]
    %v628 = vld [vmem:[#allocation9 + $0x150] sm:$0xff]
    %v629 = vld [vmem:[#allocation9 + $0x158] sm:$0xff]
    %v630 = vld [vmem:[#allocation9 + $0x160] sm:$0xff]
    %v631 = vld [vmem:[#allocation9 + $0x168] sm:$0xff]
    %v632 = vld [vmem:[#allocation9 + $0x170] sm:$0xff]
    %v633 = vld [vmem:[#allocation9 + $0x178] sm:$0xff]
    %v634 = vld [vmem:[#allocation9 + $0x180] sm:$0xff]
    %v635 = vld [vmem:[#allocation9 + $0x188] sm:$0xff]
    %v636 = vld [vmem:[#allocation9 + $0x190] sm:$0xff]
    %v637 = vld [vmem:[#allocation9 + $0x198] sm:$0xff]
    %v638 = vld [vmem:[#allocation9 + $0x1a0] sm:$0xff]
    %v639 = vld [vmem:[#allocation9 + $0x1a8] sm:$0xff]
    %v640 = vld [vmem:[#allocation9 + $0x1b0] sm:$0xff]
    %v641 = vld [vmem:[#allocation9 + $0x1b8] sm:$0xff]
    %v642 = vld [vmem:[#allocation9 + $0x1c0] sm:$0xff]
    %v643 = vld [vmem:[#allocation9 + $0x1c8] sm:$0xff]
    %v644 = vld [vmem:[#allocation9 + $0x1d0] sm:$0xff]
    %v645 = vld [vmem:[#allocation9 + $0x1d8] sm:$0xff]
    %v646 = vld [vmem:[#allocation9 + $0x1e0] sm:$0xff]
    %v647 = vld [vmem:[#allocation9 + $0x1e8] sm:$0xff]
    %v648 = vld [vmem:[#allocation9 + $0x1f0] sm:$0xff]
    %v649 = vld [vmem:[#allocation9 + $0x1f8] sm:$0xff]
    %v650 = vld [vmem:[#allocation9 + $0x200] sm:$0xff]
    %v651 = vld [vmem:[#allocation9 + $0x208] sm:$0xff]
    %v652 = vld [vmem:[#allocation9 + $0x210] sm:$0xff]
    %v653 = vld [vmem:[#allocation9 + $0x218] sm:$0xff]
    %v654 = vld [vmem:[#allocation9 + $0x220] sm:$0xff]
    %v655 = vld [vmem:[#allocation9 + $0x228] sm:$0xff]
    %v656 = vld [vmem:[#allocation9 + $0x230] sm:$0xff]
    %v657 = vld [vmem:[#allocation9 + $0x238] sm:$0xff]
    %v658 = vld [vmem:[#allocation9 + $0x240] sm:$0xff]
    %v659 = vld [vmem:[#allocation9 + $0x248] sm:$0xff]
    %v660 = vld [vmem:[#allocation9 + $0x250] sm:$0xff]
    %v661 = vld [vmem:[#allocation9 + $0x258] sm:$0xff]
    %v662 = vld [vmem:[#allocation9 + $0x260] sm:$0xff]
    %v663 = vld [vmem:[#allocation9 + $0x268] sm:$0xff]
    %v664 = vld [vmem:[#allocation9 + $0x270] sm:$0xff]
    %v665 = vld [vmem:[#allocation9 + $0x278] sm:$0xff]
    %v666 = vld [vmem:[#allocation9 + $0x280] sm:$0xff]
    %v667 = vld [vmem:[#allocation9 + $0x288] sm:$0xff]
    %v668 = vld [vmem:[#allocation9 + $0x290] sm:$0xff]
    %v669 = vld [vmem:[#allocation9 + $0x298] sm:$0xff]
    %v670 = vld [vmem:[#allocation9 + $0x2a0] sm:$0xff]
    %v671 = vld [vmem:[#allocation9 + $0x2a8] sm:$0xff]
    %v672 = vld [vmem:[#allocation9 + $0x2b0] sm:$0xff]
    %v673 = vld [vmem:[#allocation9 + $0x2b8] sm:$0xff]
    %v674 = vld [vmem:[#allocation9 + $0x2c0] sm:$0xff]
    %v675 = vld [vmem:[#allocation9 + $0x2c8] sm:$0xff]
    %v676 = vld [vmem:[#allocation9 + $0x2d0] sm:$0xff]
    %v677 = vld [vmem:[#allocation9 + $0x2d8] sm:$0xff]
    %v678 = vld [vmem:[#allocation9 + $0x2e0] sm:$0xff]
    %v679 = vld [vmem:[#allocation9 + $0x2e8] sm:$0xff]
    %v680 = vld [vmem:[#allocation9 + $0x2f0] sm:$0xff]
    %v681 = vld [vmem:[#allocation9 + $0x2f8] sm:$0xff]
    %v682 = vld [vmem:[#allocation9 + $0x300] sm:$0xff]
    %v683 = vld [vmem:[#allocation9 + $0x308] sm:$0xff]
    %v684 = vld [vmem:[#allocation9 + $0x310] sm:$0xff]
    %v685 = vld [vmem:[#allocation9 + $0x318] sm:$0xff]
    %v686 = vld [vmem:[#allocation9 + $0x320] sm:$0xff]
    %v687 = vld [vmem:[#allocation9 + $0x328] sm:$0xff]
    %v688 = vld [vmem:[#allocation9 + $0x330] sm:$0xff]
    %v689 = vld [vmem:[#allocation9 + $0x338] sm:$0xff]
    %v690 = vld [vmem:[#allocation9 + $0x340] sm:$0xff]
    %v691 = vld [vmem:[#allocation9 + $0x348] sm:$0xff]
    %v692 = vld [vmem:[#allocation9 + $0x350] sm:$0xff]
    %v693 = vld [vmem:[#allocation9 + $0x358] sm:$0xff]
    %v694 = vld [vmem:[#allocation9 + $0x360] sm:$0xff]
    %v695 = vld [vmem:[#allocation9 + $0x368] sm:$0xff]
    %v696 = vld [vmem:[#allocation9 + $0x370] sm:$0xff]
    %v697 = vld [vmem:[#allocation9 + $0x378] sm:$0xff]
    %v698 = vld [vmem:[#allocation9 + $0x380] sm:$0xff]
    %v699 = vld [vmem:[#allocation9 + $0x388] sm:$0xff]
    %v700 = vld [vmem:[#allocation9 + $0x390] sm:$0xff]
    %v701 = vld [vmem:[#allocation9 + $0x398] sm:$0xff]
    %v702 = vld [vmem:[#allocation9 + $0x3a0] sm:$0xff]
    %v703 = vld [vmem:[#allocation9 + $0x3a8] sm:$0xff]
    %v704 = vld [vmem:[#allocation9 + $0x3b0] sm:$0xff]
    %v705 = vld [vmem:[#allocation9 + $0x3b8] sm:$0xff]
    %v706 = vld [vmem:[#allocation9 + $0x3c0] sm:$0xff]
    %v707 = vld [vmem:[#allocation9 + $0x3c8] sm:$0xff]
    %v708 = vld [vmem:[#allocation9 + $0x3d0] sm:$0xff]
    %v709 = vld [vmem:[#allocation9 + $0x3d8] sm:$0xff]
    %v710 = vld [vmem:[#allocation9 + $0x3e0] sm:$0xff]
    %v711 = vld [vmem:[#allocation9 + $0x3e8] sm:$0xff]
    %v712 = vld [vmem:[#allocation9 + $0x3f0] sm:$0xff]
    %v713 = vld [vmem:[#allocation9 + $0x3f8] sm:$0xff]
    %v714 = vld [vmem:[#allocation9 + $0x400] sm:$0xff]
    %v715 = vld [vmem:[#allocation9 + $0x408] sm:$0xff]
    %v716 = vld [vmem:[#allocation9 + $0x410] sm:$0xff]
    %v717 = vld [vmem:[#allocation9 + $0x418] sm:$0xff]
    %v718 = vld [vmem:[#allocation9 + $0x420] sm:$0xff]
    %v719 = vld [vmem:[#allocation9 + $0x428] sm:$0xff]
    %v720 = vld [vmem:[#allocation9 + $0x430] sm:$0xff]
    %v721 = vld [vmem:[#allocation9 + $0x438] sm:$0xff]
    %v722 = vld [vmem:[#allocation9 + $0x440] sm:$0xff]
    %v723 = vld [vmem:[#allocation9 + $0x448] sm:$0xff]
    %v724 = vld [vmem:[#allocation9 + $0x450] sm:$0xff]
    %v725 = vld [vmem:[#allocation9 + $0x458] sm:$0xff]
    %v726 = vld [vmem:[#allocation9 + $0x460] sm:$0xff]
    %v727 = vld [vmem:[#allocation9 + $0x468] sm:$0xff]
    %v728 = vld [vmem:[#allocation9 + $0x470] sm:$0xff]
    %v729 = vld [vmem:[#allocation9 + $0x478] sm:$0xff]
    %730 = vmatprep.subr.mxu0 %v587
    %731 = vmatpush1.msra.mxu0 %v586
    %732 = vmatprep.subr.mxu0 %v596
    %733 = vmatpush1.msra.mxu0 %v595
    %734 = vmatprep.subr.mxu0 %v605
    %735 = vmatpush1.msra.mxu0 %v604
    %736 = vmatprep.subr.mxu0 %v614
    %737 = vmatpush1.msra.mxu0 %v613
    %738 = vmatprep.subr.mxu0 %v623
    %739 = vmatpush1.msra.mxu0 %v622
    %740 = vmatprep.subr.mxu0 %v632
    %741 = vmatpush1.msra.mxu0 %v631
    %742 = vmatprep.subr.mxu0 %v641
    %743 = vmatpush1.msra.mxu0 %v640
    %744 = vmatprep.subr.mxu0 %v650
    %745 = vmatpush1.msra.mxu0 %v649
    %746 = vmatprep.subr.mxu0 %v659
    %747 = vmatpush1.msra.mxu0 %v658
    %748 = vmatprep.subr.mxu0 %v668
    %749 = vmatpush1.msra.mxu0 %v667
    %750 = vmatprep.subr.mxu0 %v677
    %751 = vmatpush1.msra.mxu0 %v676
    %752 = vmatprep.subr.mxu0 %v686
    %753 = vmatpush1.msra.mxu0 %v685
    %754 = vmatprep.subr.mxu0 %v695
    %755 = vmatpush1.msra.mxu0 %v694
    %756 = vmatprep.subr.mxu0 %v704
    %757 = vmatpush1.msra.mxu0 %v703
    %758 = vmatprep.subr.mxu0 %v713
    %759 = vmatpush1.msra.mxu0 %v712
    %760 = vmatprep.subr.mxu0 %v722
    %761 = vmatpush1.msra.mxu0 %v721
    %762 = vmatprep.subr.mxu0 0.0
    %763 = vmatpush1.msra.mxu0 0.0
    %764 = vmatprep.subr.mxu0 0.0
    %765 = vmatpush1.msra.mxu0 0.0
    %766 = vmatprep.subr.mxu0 0.0
    %767 = vmatpush1.msra.mxu0 0.0
    %768 = vmatprep.subr.mxu0 0.0
    %769 = vmatpush1.msra.mxu0 0.0
    %770 = vmatprep.subr.mxu0 0.0
    %771 = vmatpush1.msra.mxu0 0.0
    %772 = vmatprep.subr.mxu0 0.0
    %773 = vmatpush1.msra.mxu0 0.0
    %774 = vmatprep.subr.mxu0 0.0
    %775 = vmatpush1.msra.mxu0 0.0
    %776 = vmatprep.subr.mxu0 0.0
    %777 = vmatpush1.msra.mxu0 0.0
    %778 = vmatprep.subr.mxu0 0.0
    %779 = vmatpush1.msra.mxu0 0.0
    %780 = vmatprep.subr.mxu0 0.0
    %781 = vmatpush1.msra.mxu0 0.0
    %782 = vmatprep.subr.mxu0 0.0
    %783 = vmatpush1.msra.mxu0 0.0
    %784 = vmatprep.subr.mxu0 0.0
    %785 = vmatpush1.msra.mxu0 0.0
    %786 = vmatprep.subr.mxu0 0.0
    %787 = vmatpush1.msra.mxu0 0.0
    %788 = vmatprep.subr.mxu0 0.0
    %789 = vmatpush1.msra.mxu0 0.0
    %790 = vmatprep.subr.mxu0 0.0
    %791 = vmatpush1.msra.mxu0 0.0
    %792 = vmatprep.subr.mxu0 0.0
    %793 = vmatpush1.msra.mxu0 0.0
    %794 = vmatprep.mubr.f32.mxu0 0.0
    %795 = vmatmul.mubr.f32.gmra.mrb[0].mxu0 %v585
    %v796 = vpop.f32.mrb[0].mxu0
    %v797 = vadd.f32 0.0, %v796
    %v798 = vpop.f32.mrb[0].mxu0
    %v799 = vadd.f32 0.0, %v798
    %800 = vdwg.mxu0
    %801 = vmatprep.subr.mxu0 %v589
    %802 = vmatpush1.msra.mxu0 %v588
    %803 = vmatprep.subr.mxu0 %v598
    %804 = vmatpush1.msra.mxu0 %v597
    %805 = vmatprep.subr.mxu0 %v607
    %806 = vmatpush1.msra.mxu0 %v606
    %807 = vmatprep.subr.mxu0 %v616
    %808 = vmatpush1.msra.mxu0 %v615
    %809 = vmatprep.subr.mxu0 %v625
    %810 = vmatpush1.msra.mxu0 %v624
    %811 = vmatprep.subr.mxu0 %v634
    %812 = vmatpush1.msra.mxu0 %v633
    %813 = vmatprep.subr.mxu0 %v643
    %814 = vmatpush1.msra.mxu0 %v642
    %815 = vmatprep.subr.mxu0 %v652
    %816 = vmatpush1.msra.mxu0 %v651
    %817 = vmatprep.subr.mxu0 %v661
    %818 = vmatpush1.msra.mxu0 %v660
    %819 = vmatprep.subr.mxu0 %v670
    %820 = vmatpush1.msra.mxu0 %v669
    %821 = vmatprep.subr.mxu0 %v679
    %822 = vmatpush1.msra.mxu0 %v678
    %823 = vmatprep.subr.mxu0 %v688
    %824 = vmatpush1.msra.mxu0 %v687
    %825 = vmatprep.subr.mxu0 %v697
    %826 = vmatpush1.msra.mxu0 %v696
    %827 = vmatprep.subr.mxu0 %v706
    %828 = vmatpush1.msra.mxu0 %v705
    %829 = vmatprep.subr.mxu0 %v715
    %830 = vmatpush1.msra.mxu0 %v714
    %831 = vmatprep.subr.mxu0 %v724
    %832 = vmatpush1.msra.mxu0 %v723
    %833 = vmatprep.subr.mxu0 0.0
    %834 = vmatpush1.msra.mxu0 0.0
    %835 = vmatprep.subr.mxu0 0.0
    %836 = vmatpush1.msra.mxu0 0.0
    %837 = vmatprep.subr.mxu0 0.0
    %838 = vmatpush1.msra.mxu0 0.0
    %839 = vmatprep.subr.mxu0 0.0
    %840 = vmatpush1.msra.mxu0 0.0
    %841 = vmatprep.subr.mxu0 0.0
    %842 = vmatpush1.msra.mxu0 0.0
    %843 = vmatprep.subr.mxu0 0.0
    %844 = vmatpush1.msra.mxu0 0.0
    %845 = vmatprep.subr.mxu0 0.0
    %846 = vmatpush1.msra.mxu0 0.0
    %847 = vmatprep.subr.mxu0 0.0
    %848 = vmatpush1.msra.mxu0 0.0
    %849 = vmatprep.subr.mxu0 0.0
    %850 = vmatpush1.msra.mxu0 0.0
    %851 = vmatprep.subr.mxu0 0.0
    %852 = vmatpush1.msra.mxu0 0.0
    %853 = vmatprep.subr.mxu0 0.0
    %854 = vmatpush1.msra.mxu0 0.0
    %855 = vmatprep.subr.mxu0 0.0
    %856 = vmatpush1.msra.mxu0 0.0
    %857 = vmatprep.subr.mxu0 0.0
    %858 = vmatpush1.msra.mxu0 0.0
    %859 = vmatprep.subr.mxu0 0.0
    %860 = vmatpush1.msra.mxu0 0.0
    %861 = vmatprep.subr.mxu0 0.0
    %862 = vmatpush1.msra.mxu0 0.0
    %863 = vmatprep.subr.mxu0 0.0
    %864 = vmatpush1.msra.mxu0 0.0
    %865 = vmatprep.mubr.f32.mxu0 0.0
    %866 = vmatmul.mubr.f32.gmra.mrb[0].mxu0 %v585
    %v867 = vpop.f32.mrb[0].mxu0
    %v868 = vadd.f32 0.0, %v867
    %v869 = vpop.f32.mrb[0].mxu0
    %v870 = vadd.f32 0.0, %v869
    %871 = vdwg.mxu0
    %872 = vmatprep.subr.mxu0 %v591
    %873 = vmatpush1.msra.mxu0 %v590
    %874 = vmatprep.subr.mxu0 %v600
    %875 = vmatpush1.msra.mxu0 %v599
    %876 = vmatprep.subr.mxu0 %v609
    %877 = vmatpush1.msra.mxu0 %v608
    %878 = vmatprep.subr.mxu0 %v618
    %879 = vmatpush1.msra.mxu0 %v617
    %880 = vmatprep.subr.mxu0 %v627
    %881 = vmatpush1.msra.mxu0 %v626
    %882 = vmatprep.subr.mxu0 %v636
    %883 = vmatpush1.msra.mxu0 %v635
    %884 = vmatprep.subr.mxu0 %v645
    %885 = vmatpush1.msra.mxu0 %v644
    %886 = vmatprep.subr.mxu0 %v654
    %887 = vmatpush1.msra.mxu0 %v653
    %888 = vmatprep.subr.mxu0 %v663
    %889 = vmatpush1.msra.mxu0 %v662
    %890 = vmatprep.subr.mxu0 %v672
    %891 = vmatpush1.msra.mxu0 %v671
    %892 = vmatprep.subr.mxu0 %v681
    %893 = vmatpush1.msra.mxu0 %v680
    %894 = vmatprep.subr.mxu0 %v690
    %895 = vmatpush1.msra.mxu0 %v689
    %896 = vmatprep.subr.mxu0 %v699
    %897 = vmatpush1.msra.mxu0 %v698
    %898 = vmatprep.subr.mxu0 %v708
    %899 = vmatpush1.msra.mxu0 %v707
    %900 = vmatprep.subr.mxu0 %v717
    %901 = vmatpush1.msra.mxu0 %v716
    %902 = vmatprep.subr.mxu0 %v726
    %903 = vmatpush1.msra.mxu0 %v725
    %904 = vmatprep.subr.mxu0 0.0
    %905 = vmatpush1.msra.mxu0 0.0
    %906 = vmatprep.subr.mxu0 0.0
    %907 = vmatpush1.msra.mxu0 0.0
    %908 = vmatprep.subr.mxu0 0.0
    %909 = vmatpush1.msra.mxu0 0.0
    %910 = vmatprep.subr.mxu0 0.0
    %911 = vmatpush1.msra.mxu0 0.0
    %912 = vmatprep.subr.mxu0 0.0
    %913 = vmatpush1.msra.mxu0 0.0
    %914 = vmatprep.subr.mxu0 0.0
    %915 = vmatpush1.msra.mxu0 0.0
    %916 = vmatprep.subr.mxu0 0.0
    %917 = vmatpush1.msra.mxu0 0.0
    %918 = vmatprep.subr.mxu0 0.0
    %919 = vmatpush1.msra.mxu0 0.0
    %920 = vmatprep.subr.mxu0 0.0
    %921 = vmatpush1.msra.mxu0 0.0
    %922 = vmatprep.subr.mxu0 0.0
    %923 = vmatpush1.msra.mxu0 0.0
    %924 = vmatprep.subr.mxu0 0.0
    %925 = vmatpush1.msra.mxu0 0.0
    %926 = vmatprep.subr.mxu0 0.0
    %927 = vmatpush1.msra.mxu0 0.0
    %928 = vmatprep.subr.mxu0 0.0
    %929 = vmatpush1.msra.mxu0 0.0
    %930 = vmatprep.subr.mxu0 0.0
    %931 = vmatpush1.msra.mxu0 0.0
    %932 = vmatprep.subr.mxu0 0.0
    %933 = vmatpush1.msra.mxu0 0.0
    %934 = vmatprep.subr.mxu0 0.0
    %935 = vmatpush1.msra.mxu0 0.0
    %936 = vmatprep.mubr.f32.mxu0 0.0
    %937 = vmatmul.mubr.f32.gmra.mrb[0].mxu0 %v585
    %v938 = vpop.f32.mrb[0].mxu0
    %v939 = vadd.f32 0.0, %v938
    %v940 = vpop.f32.mrb[0].mxu0
    %v941 = vadd.f32 0.0, %v940
    %942 = vdwg.mxu0
    %943 = vmatprep.subr.mxu0 %v593
    %944 = vmatpush1.msra.mxu0 %v592
    %945 = vmatprep.subr.mxu0 %v602
    %946 = vmatpush1.msra.mxu0 %v601
    %947 = vmatprep.subr.mxu0 %v611
    %948 = vmatpush1.msra.mxu0 %v610
    %949 = vmatprep.subr.mxu0 %v620
    %950 = vmatpush1.msra.mxu0 %v619
    %951 = vmatprep.subr.mxu0 %v629
    %952 = vmatpush1.msra.mxu0 %v628
    %953 = vmatprep.subr.mxu0 %v638
    %954 = vmatpush1.msra.mxu0 %v637
    %955 = vmatprep.subr.mxu0 %v647
    %956 = vmatpush1.msra.mxu0 %v646
    %957 = vmatprep.subr.mxu0 %v656
    %958 = vmatpush1.msra.mxu0 %v655
    %959 = vmatprep.subr.mxu0 %v665
    %960 = vmatpush1.msra.mxu0 %v664
    %961 = vmatprep.subr.mxu0 %v674
    %962 = vmatpush1.msra.mxu0 %v673
    %963 = vmatprep.subr.mxu0 %v683
    %964 = vmatpush1.msra.mxu0 %v682
    %965 = vmatprep.subr.mxu0 %v692
    %966 = vmatpush1.msra.mxu0 %v691
    %967 = vmatprep.subr.mxu0 %v701
    %968 = vmatpush1.msra.mxu0 %v700
    %969 = vmatprep.subr.mxu0 %v710
    %970 = vmatpush1.msra.mxu0 %v709
    %971 = vmatprep.subr.mxu0 %v719
    %972 = vmatpush1.msra.mxu0 %v718
    %973 = vmatprep.subr.mxu0 %v728
    %974 = vmatpush1.msra.mxu0 %v727
    %975 = vmatprep.subr.mxu0 0.0
    %976 = vmatpush1.msra.mxu0 0.0
    %977 = vmatprep.subr.mxu0 0.0
    %978 = vmatpush1.msra.mxu0 0.0
    %979 = vmatprep.subr.mxu0 0.0
    %980 = vmatpush1.msra.mxu0 0.0
    %981 = vmatprep.subr.mxu0 0.0
    %982 = vmatpush1.msra.mxu0 0.0
    %983 = vmatprep.subr.mxu0 0.0
    %984 = vmatpush1.msra.mxu0 0.0
    %985 = vmatprep.subr.mxu0 0.0
    %986 = vmatpush1.msra.mxu0 0.0
    %987 = vmatprep.subr.mxu0 0.0
    %988 = vmatpush1.msra.mxu0 0.0
    %989 = vmatprep.subr.mxu0 0.0
    %990 = vmatpush1.msra.mxu0 0.0
    %991 = vmatprep.subr.mxu0 0.0
    %992 = vmatpush1.msra.mxu0 0.0
    %993 = vmatprep.subr.mxu0 0.0
    %994 = vmatpush1.msra.mxu0 0.0
    %995 = vmatprep.subr.mxu0 0.0
    %996 = vmatpush1.msra.mxu0 0.0
    %997 = vmatprep.subr.mxu0 0.0
    %998 = vmatpush1.msra.mxu0 0.0
    %999 = vmatprep.subr.mxu0 0.0
    %1000 = vmatpush1.msra.mxu0 0.0
    %1001 = vmatprep.subr.mxu0 0.0
    %1002 = vmatpush1.msra.mxu0 0.0
    %1003 = vmatprep.subr.mxu0 0.0
    %1004 = vmatpush1.msra.mxu0 0.0
    %1005 = vmatprep.subr.mxu0 0.0
    %1006 = vmatpush1.msra.mxu0 0.0
    %1007 = vmatprep.mubr.f32.mxu0 0.0
    %1008 = vmatmul.mubr.f32.gmra.mrb[0].mxu0 %v585
    %v1009 = vpop.f32.mrb[0].mxu0
    %v1010 = vadd.f32 0.0, %v1009
    %v1011 = vpop.f32.mrb[0].mxu0
    %v1012 = vadd.f32 0.0, %v1011
    %1013 = vdwg.mxu0
    %1014 = vmatprep.subr.mxu0 0.0
    %1015 = vmatpush1.msra.mxu0 %v594
    %1016 = vmatprep.subr.mxu0 0.0
    %1017 = vmatpush1.msra.mxu0 %v603
    %1018 = vmatprep.subr.mxu0 0.0
    %1019 = vmatpush1.msra.mxu0 %v612
    %1020 = vmatprep.subr.mxu0 0.0
    %1021 = vmatpush1.msra.mxu0 %v621
    %1022 = vmatprep.subr.mxu0 0.0
    %1023 = vmatpush1.msra.mxu0 %v630
    %1024 = vmatprep.subr.mxu0 0.0
    %1025 = vmatpush1.msra.mxu0 %v639
    %1026 = vmatprep.subr.mxu0 0.0
    %1027 = vmatpush1.msra.mxu0 %v648
    %1028 = vmatprep.subr.mxu0 0.0
    %1029 = vmatpush1.msra.mxu0 %v657
    %1030 = vmatprep.subr.mxu0 0.0
    %1031 = vmatpush1.msra.mxu0 %v666
    %1032 = vmatprep.subr.mxu0 0.0
    %1033 = vmatpush1.msra.mxu0 %v675
    %1034 = vmatprep.subr.mxu0 0.0
    %1035 = vmatpush1.msra.mxu0 %v684
    %1036 = vmatprep.subr.mxu0 0.0
    %1037 = vmatpush1.msra.mxu0 %v693
    %1038 = vmatprep.subr.mxu0 0.0
    %1039 = vmatpush1.msra.mxu0 %v702
    %1040 = vmatprep.subr.mxu0 0.0
    %1041 = vmatpush1.msra.mxu0 %v711
    %1042 = vmatprep.subr.mxu0 0.0
    %1043 = vmatpush1.msra.mxu0 %v720
    %1044 = vmatprep.subr.mxu0 0.0
    %1045 = vmatpush1.msra.mxu0 %v729
    %1046 = vmatprep.subr.mxu0 0.0
    %1047 = vmatpush1.msra.mxu0 0.0
    %1048 = vmatprep.subr.mxu0 0.0
    %1049 = vmatpush1.msra.mxu0 0.0
    %1050 = vmatprep.subr.mxu0 0.0
    %1051 = vmatpush1.msra.mxu0 0.0
    %1052 = vmatprep.subr.mxu0 0.0
    %1053 = vmatpush1.msra.mxu0 0.0
    %1054 = vmatprep.subr.mxu0 0.0
    %1055 = vmatpush1.msra.mxu0 0.0
    %1056 = vmatprep.subr.mxu0 0.0
    %1057 = vmatpush1.msra.mxu0 0.0
    %1058 = vmatprep.subr.mxu0 0.0
    %1059 = vmatpush1.msra.mxu0 0.0
    %1060 = vmatprep.subr.mxu0 0.0
    %1061 = vmatpush1.msra.mxu0 0.0
    %1062 = vmatprep.subr.mxu0 0.0
    %1063 = vmatpush1.msra.mxu0 0.0
    %1064 = vmatprep.subr.mxu0 0.0
    %1065 = vmatpush1.msra.mxu0 0.0
    %1066 = vmatprep.subr.mxu0 0.0
    %1067 = vmatpush1.msra.mxu0 0.0
    %1068 = vmatprep.subr.mxu0 0.0
    %1069 = vmatpush1.msra.mxu0 0.0
    %1070 = vmatprep.subr.mxu0 0.0
    %1071 = vmatpush1.msra.mxu0 0.0
    %1072 = vmatprep.subr.mxu0 0.0
    %1073 = vmatpush1.msra.mxu0 0.0
    %1074 = vmatprep.subr.mxu0 0.0
    %1075 = vmatpush1.msra.mxu0 0.0
    %1076 = vmatprep.subr.mxu0 0.0
    %1077 = vmatpush1.msra.mxu0 0.0
    %1078 = vmatprep.mubr.f32.mxu0 0.0
    %1079 = vmatmul.mubr.f32.gmra.mrb[0].mxu0 %v585
    %v1080 = vpop.f32.mrb[0].mxu0
    %v1081 = vadd.f32 0.0, %v1080
    %v1082 = vpop.f32.mrb[0].mxu0
    %1083 = vdwg.mxu0
    %v1084 = vmax.f32 %v797, 0.0
    %s1085 = sld [smem:[#allocation2 + $0x8]]
    %v1086 = vstv %s1085
    %v1087 = vmul.f32 %v1086, %v1084
    %v1088 = vadd.f32 %v1081, %v1087
    %v1089 = vtanh.pop %v799
    %s1090 = sld [smem:[#allocation2 + $0x9]]
    %v1091 = vstv %s1090
    %v1092 = vmul.f32 %v1091, %v1089
    %v1093 = vadd.f32 %v1088, %v1092
    %v1094 = vmul.f32 %v868, 0.5
    %v1095 = vtanh.pop %v1094
    %v1096 = vadd.f32 %v1095, 1.0
    %v1097 = vmul.f32 %v1096, 0.5
    %s1098 = sld [smem:[#allocation2 + $0xa]]
    %v1099 = vstv %s1098
    %v1100 = vmul.f32 %v1099, %v1097
    %v1101 = vadd.f32 %v1093, %v1100
    %vm1102 = vcmp.gt.f32.partialorder %v870, 0.0
    %v1103 = vmul.f32 %v870, 0.2
    %v1104 = vsel %vm1102, %v870, %v1103
    %s1105 = sld [smem:[#allocation2 + $0xb]]
    %v1106 = vstv %s1105
    %v1107 = vmul.f32 %v1106, %v1104
    %v1108 = vadd.f32 %v1101, %v1107
    %v1109 = vmax.f32 %v939, 0.0
    %s1110 = sld [smem:[#allocation2 + $0xc]]
    %v1111 = vstv %s1110
    %v1112 = vmul.f32 %v1111, %v1109
    %v1113 = vadd.f32 %v1108, %v1112
    %v1114 = vtanh.pop %v941
    %s1115 = sld [smem:[#allocation2 + $0xd]]
    %v1116 = vstv %s1115
    %v1117 = vmul.f32 %v1116, %v1114
    %v1118 = vadd.f32 %v1113, %v1117
    %v1119 = vmul.f32 %v1010, 0.5
    %v1120 = vtanh.pop %v1119
    %v1121 = vadd.f32 %v1120, 1.0
    %v1122 = vmul.f32 %v1121, 0.5
    %s1123 = sld [smem:[#allocation2 + $0xe]]
    %v1124 = vstv %s1123
    %v1125 = vmul.f32 %v1124, %v1122
    %v1126 = vadd.f32 %v1118, %v1125
    %vm1127 = vcmp.gt.f32.partialorder %v1012, 0.0
    %v1128 = vmul.f32 %v1012, 0.2
    %v1129 = vsel %vm1127, %v1012, %v1128
    %s1130 = sld [smem:[#allocation2 + $0xf]]
    %v1131 = vstv %s1130
    %v1132 = vmul.f32 %v1131, %v1129
    %v1133 = vadd.f32 %v1126, %v1132
    %v1134 = vsel %vm584, 1.0, %v1133
    %v1135 = vld [vmem:[#allocation10] sm:$0xff]
    %v1136 = vld [vmem:[#allocation10 + $0x8] sm:$0xff]
    %v1137 = vld [vmem:[#allocation10 + $0x10] sm:$0xff]
    %v1138 = vld [vmem:[#allocation10 + $0x18] sm:$0xff]
    %v1139 = vld [vmem:[#allocation10 + $0x20] sm:$0xff]
    %v1140 = vld [vmem:[#allocation10 + $0x28] sm:$0xff]
    %v1141 = vld [vmem:[#allocation10 + $0x30] sm:$0xff]
    %v1142 = vld [vmem:[#allocation10 + $0x38] sm:$0xff]
    %v1143 = vld [vmem:[#allocation10 + $0x40] sm:$0xff]
    %v1144 = vld [vmem:[#allocation10 + $0x48] sm:$0xff]
    %v1145 = vld [vmem:[#allocation10 + $0x50] sm:$0xff]
    %v1146 = vld [vmem:[#allocation10 + $0x58] sm:$0xff]
    %v1147 = vld [vmem:[#allocation10 + $0x60] sm:$0xff]
    %v1148 = vld [vmem:[#allocation10 + $0x68] sm:$0xff]
    %v1149 = vld [vmem:[#allocation10 + $0x70] sm:$0xff]
    %v1150 = vld [vmem:[#allocation10 + $0x78] sm:$0xff]
    %1151 = vmatprep.subr.mxu0 0.0
    %1152 = vmatpush1.msra.mxu0 %v1135
    %1153 = vmatprep.subr.mxu0 0.0
    %1154 = vmatpush1.msra.mxu0 %v1136
    %1155 = vmatprep.subr.mxu0 0.0
    %1156 = vmatpush1.msra.mxu0 %v1137
    %1157 = vmatprep.subr.mxu0 0.0
    %1158 = vmatpush1.msra.mxu0 %v1138
    %1159 = vmatprep.subr.mxu0 0.0
    %1160 = vmatpush1.msra.mxu0 %v1139
    %1161 = vmatprep.subr.mxu0 0.0
    %1162 = vmatpush1.msra.mxu0 %v1140
    %1163 = vmatprep.subr.mxu0 0.0
    %1164 = vmatpush1.msra.mxu0 %v1141
    %1165 = vmatprep.subr.mxu0 0.0
    %1166 = vmatpush1.msra.mxu0 %v1142
    %1167 = vmatprep.subr.mxu0 0.0
    %1168 = vmatpush1.msra.mxu0 %v1143
    %1169 = vmatprep.subr.mxu0 0.0
    %1170 = vmatpush1.msra.mxu0 %v1144
    %1171 = vmatprep.subr.mxu0 0.0
    %1172 = vmatpush1.msra.mxu0 %v1145
    %1173 = vmatprep.subr.mxu0 0.0
    %1174 = vmatpush1.msra.mxu0 %v1146
    %1175 = vmatprep.subr.mxu0 0.0
    %1176 = vmatpush1.msra.mxu0 %v1147
    %1177 = vmatprep.subr.mxu0 0.0
    %1178 = vmatpush1.msra.mxu0 %v1148
    %1179 = vmatprep.subr.mxu0 0.0
    %1180 = vmatpush1.msra.mxu0 %v1149
    %1181 = vmatprep.subr.mxu0 0.0
    %1182 = vmatpush1.msra.mxu0 %v1150
    %1183 = vmatprep.subr.mxu0 0.0
    %1184 = vmatpush1.msra.mxu0 0.0
    %1185 = vmatprep.subr.mxu0 0.0
    %1186 = vmatpush1.msra.mxu0 0.0
    %1187 = vmatprep.subr.mxu0 0.0
    %1188 = vmatpush1.msra.mxu0 0.0
    %1189 = vmatprep.subr.mxu0 0.0
    %1190 = vmatpush1.msra.mxu0 0.0
    %1191 = vmatprep.subr.mxu0 0.0
    %1192 = vmatpush1.msra.mxu0 0.0
    %1193 = vmatprep.subr.mxu0 0.0
    %1194 = vmatpush1.msra.mxu0 0.0
    %1195 = vmatprep.subr.mxu0 0.0
    %1196 = vmatpush1.msra.mxu0 0.0
    %1197 = vmatprep.subr.mxu0 0.0
    %1198 = vmatpush1.msra.mxu0 0.0
    %1199 = vmatprep.subr.mxu0 0.0
    %1200 = vmatpush1.msra.mxu0 0.0
    %1201 = vmatprep.subr.mxu0 0.0
    %1202 = vmatpush1.msra.mxu0 0.0
    %1203 = vmatprep.subr.mxu0 0.0
    %1204 = vmatpush1.msra.mxu0 0.0
    %1205 = vmatprep.subr.mxu0 0.0
    %1206 = vmatpush1.msra.mxu0 0.0
    %1207 = vmatprep.subr.mxu0 0.0
    %1208 = vmatpush1.msra.mxu0 0.0
    %1209 = vmatprep.subr.mxu0 0.0
    %1210 = vmatpush1.msra.mxu0 0.0
    %1211 = vmatprep.subr.mxu0 0.0
    %1212 = vmatpush1.msra.mxu0 0.0
    %1213 = vmatprep.subr.mxu0 0.0
    %1214 = vmatpush1.msra.mxu0 0.0
    %1215 = vmatprep.mubr.f32.mxu0 0.0
    %1216 = vmatmul.mubr.f32.gmra.mrb[0].mxu0 %v1134
    %v1217 = vpop.f32.mrb[0].mxu0
    %v1218 = vadd.f32 0.0, %v1217
    %v1219 = vpop.f32.mrb[0].mxu0
    %1220 = vdwg.mxu0
    %1221 = vst [vmem:[#allocation12] sm:$0xff] %v1218
    // Predicated region
    $region46: #{tpu_custom_call.1} parent=1 // pred_check
      _
    $region47: #{tpu_custom_call.1} parent=1 // pred_check_branch
      %1223 = sbr.rel (0) target = $region49
    $region48: #{tpu_custom_call.1} parent=1 // pred_region
      %s1225 = ssub.s32 128, 128
      %1226 = vsyncadd [#allocation4], %s1225
      %s1228 = sshll.u32 [#allocation12], 4
      %s1229 = int_to_ptr.vmem [resolvable:$true] %s1228
      %1231 = dma.vmem_to_hbm [thread:$0]  %s1229, 128, %s6, [#allocation4]
    $region49: #{tpu_custom_call.1} parent=1 // pred_fallthru
      _
    // Predicated region
    $region50: #{tpu_custom_call.1} parent=1 // pred_check
      _
    $region51: #{tpu_custom_call.1} parent=1 // pred_check_branch
      %1233 = sbr.rel (0) target = $region53
    $region52: #{tpu_custom_call.1} parent=1 // pred_region
      %1234 = dma.done [#allocation4], 128
    $region53: #{tpu_custom_call.1} parent=1 // pred_fallthru
      _
    %1235 = vsyncpa [#allocation3], 1
    %1236 = vsyncpa [#allocation8], 1
    %1237 = vsyncpa [#allocation11], 1
    %1238 = vsyncpa [#allocation4], 1
    %1239 = vsyncpa [#allocation5], 1

</llo_original>
